<compile_context>
chip_gen: v7x
topology: tpu7x:2x2x1
jax: 0.10.0
libtpu: 0.0.40
codegen_flags: <defaults>
</compile_context>

<pallas_src>
import jax
import jax.numpy as jnp
import numpy as np
from jax.experimental import pallas as pl
from jax.experimental.pallas import tpu as pltpu


def _gru_dir_recurrence_kernel(gi_ref, whh_ref, bhh_ref, len_ref,
                               out_ref, hfinal_ref, h_ref):
    """One grid step = one chunk of TT timesteps of ONE direction.

    Grid is (2, n_chunks): axis 0 is the direction (0=fwd, 1=bwd, 'parallel' -> one per
    TensorCore on v7x), axis 1 is the time chunk ('arbitrary', sequential recurrence).
    For the backward direction the chunk index_map walks chunks in reverse and the loop
    below flips the within-chunk index, so gi is consumed and out is produced in natural
    (un-reversed) time order for both directions.
    """
    d = pl.program_id(0)          # direction: 0 forward, 1 backward
    c = pl.program_id(1)          # time-chunk counter (recurrence order)
    TT = gi_ref.shape[0]          # timesteps per chunk
    H = h_ref.shape[1]
    Tp = TT * pl.num_programs(1)  # padded sequence length

    @pl.when(c == 0)
    def _():
        h_ref[...] = jnp.zeros_like(h_ref)

    whh = whh_ref[...]            # (H, 3H) bf16 recurrent weights (this direction)
    bhh = bhh_ref[...]            # (1, 3H) f32 recurrent bias
    lens = len_ref[...]           # (B, 1) int32 valid lengths

    k0 = c * TT

    def step(s, h):
        k = k0 + s                                # recurrence step counter 0..Tp-1
        sidx = s + d * (TT - 1 - 2 * s)           # within-chunk index (flipped for bwd)
        t = k + d * (Tp - 1 - 2 * k)              # actual time position being consumed
        gi = gi_ref[sidx].astype(jnp.float32)     # (B, 3H), bih already folded in
        # bf16 MXU matmul on the serial critical path, f32 accumulation.
        gh = jnp.dot(h.astype(jnp.bfloat16), whh,
                     preferred_element_type=jnp.float32) + bhh
        # PyTorch GRU gate order (r, z, n); r multiplies (h@whh_n + bhh_n).
        # (Gate slices are lane-aligned whenever H is a multiple of 128.)
        rz = jax.nn.sigmoid(gi[:, :2 * H] + gh[:, :2 * H])
        r = rz[:, :H]
        z = rz[:, H:]
        n = jnp.tanh(gi[:, 2 * H:] + r * gh[:, 2 * H:])
        h_new = (1.0 - z) * n + z * h
        valid = t < lens                          # (B, 1) bool
        out_ref[sidx] = jnp.where(valid, h_new, 0.0)   # zeros at padded positions
        return jnp.where(valid, h_new, h)              # length-masked state carry

    h = jax.lax.fori_loop(0, TT, step, h_ref[...], unroll=min(8, TT))
    h_ref[...] = h

    # h already holds this direction's final hidden state (updates are length-masked);
    # only store it on the last chunk (the block is resident across the chunk axis).
    @pl.when(c == pl.num_programs(1) - 1)
    def _():
        hfinal_ref[...] = h


def _vmem_limit_bytes():
    """Generation-aware VMEM budget: ~3/4 of physical VMEM.

    v7x (64 MiB physical) -> ~48 MiB; v5e/v6e (128 MiB) -> ~96 MiB. Conservative
    fallback if the query is unavailable.
    """
    phys = None
    try:
        phys = getattr(pltpu.get_tpu_info(), "vmem_capacity_bytes", None)
    except Exception:
        phys = None
    if not phys:
        phys = 64 * 1024 * 1024
    return int(phys) * 3 // 4


def _run_recurrence(gi, whh_stack, bhh_stack, lengths_col, tt, vmem_limit):
    two, Tp, B, three_h = gi.shape
    H = three_h // 3
    n_chunks = Tp // tt

    def time_idx(d, c):
        # forward direction walks chunks 0..n-1; backward walks n-1..0
        return c + d * (n_chunks - 1 - 2 * c)

    grid_spec = pltpu.PrefetchScalarGridSpec(
        num_scalar_prefetch=0,
        grid=(2, n_chunks),
        in_specs=[
            # gi chunk for this direction (bf16), natural time order in HBM.
            pl.BlockSpec((None, tt, B, three_h),
                         lambda d, c: (d, time_idx(d, c), 0, 0)),
            # Per-direction recurrent weights / bias / lengths: resident constants.
            pl.BlockSpec((None, H, three_h), lambda d, c: (d, 0, 0)),
            pl.BlockSpec((None, 1, three_h), lambda d, c: (d, 0, 0)),
            pl.BlockSpec((B, 1), lambda d, c: (0, 0)),
        ],
        out_specs=[
            # Per-step outputs, already un-reversed for both directions.
            pl.BlockSpec((None, tt, B, H),
                         lambda d, c: (d, time_idx(d, c), 0, 0)),
            # Final hidden state per direction.
            pl.BlockSpec((None, B, H), lambda d, c: (d, 0, 0)),
        ],
        scratch_shapes=[pltpu.VMEM((B, H), jnp.float32)],   # carried hidden state
    )

    return pl.pallas_call(
        _gru_dir_recurrence_kernel,
        out_shape=(jax.ShapeDtypeStruct((2, Tp, B, H), jnp.float32),
                   jax.ShapeDtypeStruct((2, B, H), jnp.float32)),
        grid_spec=grid_spec,
        compiler_params=pltpu.CompilerParams(
            # direction axis independent (-> both TCs on v7x); time axis sequential.
            dimension_semantics=("parallel", "arbitrary"),
            vmem_limit_bytes=vmem_limit),
    )(gi, whh_stack, bhh_stack, lengths_col)


def bigru_encoder(x, lengths, params, *, time_chunk=32):
    """Pallas bidirectional-GRU encoder.

    Args:
      x: (B, T, D) float32, batch-first padded sequences (max(lengths) == T, mirroring
         pad_packed_sequence which pads to the batch max length).
      lengths: (B,) int valid lengths (must be >= 1, as in pack_padded_sequence).
      params: dict of GRU weights in PyTorch layout.

    Returns:
      out_sequence: (B, T, 2H), final_h: (B, 2H)
    """
    B, T, D = x.shape
    H = params["whh_f"].shape[1]

    tt = min(time_chunk, T)
    Tp = pl.cdiv(T, tt) * tt

    # Stacked per-direction parameters.
    wih_stack = jnp.stack([params["wih_f"].T, params["wih_b"].T])              # (2, D, 3H)
    bih_stack = jnp.stack([params["bih_f"], params["bih_b"]])                  # (2, 3H)
    whh_stack = jnp.stack([params["whh_f"].T,
                           params["whh_b"].T]).astype(jnp.bfloat16)            # (2, H, 3H)
    bhh_stack = jnp.stack([params["bhh_f"],
                           params["bhh_b"]])[:, None, :].astype(jnp.float32)   # (2, 1, 3H)

    # Hoisted input projection: ONE time-parallel batched matmul for both directions,
    # emitted directly in the kernel's (dir, time, batch, gates) layout and streamed in
    # bf16 (no time-reversal pass; the kernel's index_map handles the backward walk).
    gi = jnp.einsum("btd,zdh->ztbh", x.astype(jnp.float32), wih_stack,
                    preferred_element_type=jnp.float32)
    gi = (gi + bih_stack[:, None, None, :]).astype(jnp.bfloat16)               # (2, T, B, 3H)
    if Tp != T:
        gi = jnp.pad(gi, ((0, 0), (0, Tp - T), (0, 0), (0, 0)))

    lengths_col = lengths.astype(jnp.int32).reshape(B, 1)

    out, hfin = _run_recurrence(gi, whh_stack, bhh_stack, lengths_col, tt,
                                _vmem_limit_bytes())

    # out: (2, Tp, B, H); both directions already in natural time order, so assembly is
    # a single concat + transpose (typically one fused copy in XLA), no reversal.
    out_seq = jnp.transpose(
        jnp.concatenate([out[0, :T], out[1, :T]], axis=-1), (1, 0, 2))         # (B, T, 2H)
    final_h = jnp.concatenate([hfin[0], hfin[1]], axis=-1)                     # (B, 2H)
    return out_seq, final_h


# ---------------- pure-JAX reference (for correctness check only) ----------------
def _bigru_reference(x, lengths, params):
    B, T, D = x.shape
    H = params["whh_f"].shape[1]

    def cell(h, xt, wih, whh, bih, bhh):
        gi = xt @ wih.T + bih
        gh = h @ whh.T + bhh
        r = jax.nn.sigmoid(gi[:, :H] + gh[:, :H])
        z = jax.nn.sigmoid(gi[:, H:2 * H] + gh[:, H:2 * H])
        n = jnp.tanh(gi[:, 2 * H:] + r * gh[:, 2 * H:])
        return (1.0 - z) * n + z * h

    def run_dir(reverse, wih, whh, bih, bhh):
        h = jnp.zeros((B, H), jnp.float32)
        out = [None] * T
        order = range(T - 1, -1, -1) if reverse else range(T)
        for t in order:
            valid = (t < lengths)[:, None]
            h_new = cell(h, x[:, t], wih, whh, bih, bhh)
            h = jnp.where(valid, h_new, h)
            out[t] = jnp.where(valid, h_new, 0.0)
        return jnp.stack(out, axis=1), h

    of, hf = run_dir(False, params["wih_f"], params["whh_f"],
                     params["bih_f"], params["bhh_f"])
    ob, hb = run_dir(True, params["wih_b"], params["whh_b"],
                     params["bih_b"], params["bhh_b"])
    return jnp.concatenate([of, ob], -1), jnp.concatenate([hf, hb], -1)


if __name__ == "__main__":
    B, T, D, H = 2, 8, 16, 32

    key = jax.random.PRNGKey(0)
    keys = jax.random.split(key, 9)
    k = 1.0 / np.sqrt(H)

    def u(kk, shape):
        return jax.random.uniform(kk, shape, jnp.float32, -k, k)

    params = dict(
        wih_f=u(keys[0], (3 * H, D)), whh_f=u(keys[1], (3 * H, H)),
        bih_f=u(keys[2], (3 * H,)), bhh_f=u(keys[3], (3 * H,)),
        wih_b=u(keys[4], (3 * H, D)), whh_b=u(keys[5], (3 * H, H)),
        bih_b=u(keys[6], (3 * H,)), bhh_b=u(keys[7], (3 * H,)),
    )

    x = jax.random.normal(keys[8], (B, T, D), jnp.float32)
    lengths = jnp.array([8, 5], dtype=jnp.int32)   # max(lengths) == T

    out_seq, final_h = jax.block_until_ready(bigru_encoder(x, lengths, params))
    assert out_seq.shape == (B, T, 2 * H) and final_h.shape == (B, 2 * H)

    ref_seq, ref_final = _bigru_reference(x, lengths, params)
    # Tolerance loosened slightly vs. the pure-f32 version because gi streaming and the
    # recurrent matmul now run in bf16 (f32 accumulation / gate math).
    np.testing.assert_allclose(np.asarray(out_seq), np.asarray(ref_seq),
                               rtol=3e-2, atol=3e-2)
    np.testing.assert_allclose(np.asarray(final_h), np.asarray(ref_final),
                               rtol=3e-2, atol=3e-2)

    print("KERNEL_OK")
</pallas_src>

<mosaic_0001>
module attributes {stable_mosaic.version = 11 : i64} {
  func.func @_gru_dir_recurrence_kernel(%arg0: i32, %arg1: i32, %arg2: memref<1x8x2x96xbf16, #tpu.memory_space<vmem>>, %arg3: memref<1x32x96xbf16, #tpu.memory_space<vmem>>, %arg4: memref<1x1x96xf32, #tpu.memory_space<vmem>>, %arg5: memref<2x1xi32, #tpu.memory_space<vmem>>, %arg6: memref<1x8x2x32xf32, #tpu.memory_space<vmem>>, %arg7: memref<1x2x32xf32, #tpu.memory_space<vmem>>, %arg8: memref<2x32xf32, #tpu.memory_space<vmem>>) attributes {dimension_semantics = [#tpu.dimension_semantics<parallel>, #tpu.dimension_semantics<arbitrary>], iteration_bounds = array<i64: 2, 1>, scalar_prefetch = 0 : i64, scratch_operands = 1 : i64, tpu.core_type = #tpu.core_type<tc>, window_params = [{transform_indices = @transform_0, window_bounds = array<i64: 1, 8, 2, 96>}, {transform_indices = @transform_1, window_bounds = array<i64: 1, 32, 96>}, {transform_indices = @transform_2, window_bounds = array<i64: 1, 1, 96>}, {pipeline_mode = #tpu.pipeline_mode<synchronous>, transform_indices = @transform_3, window_bounds = array<i64: 2, 1>}, {transform_indices = @transform_4, window_bounds = array<i64: 1, 8, 2, 32>}, {transform_indices = @transform_5, window_bounds = array<i64: 1, 2, 32>}]} {
    %c0_i32 = arith.constant 0 : i32
    %0 = arith.cmpi eq, %arg1, %c0_i32 : i32
    %1 = arith.extui %0 : i1 to i32
    %c0_i32_0 = arith.constant 0 : i32
    %2 = arith.cmpi ne, %1, %c0_i32_0 : i32
    scf.if %2 {
      %cst_127 = arith.constant 0.000000e+00 : f32
      %414 = vector.broadcast %cst_127 : f32 to vector<2x32xf32>
      %c0_128 = arith.constant 0 : index
      %c0_129 = arith.constant 0 : index
      %415 = vector.load %arg8[%c0_128, %c0_129] : memref<2x32xf32, #tpu.memory_space<vmem>>, vector<2x32xf32>
      tpu.vector_store %arg8[%c0_128, %c0_129], %414 {strides = array<i32>} : memref<2x32xf32, #tpu.memory_space<vmem>>, vector<2x32xf32>,
    } else {
    }
    %c0 = arith.constant 0 : index
    %c0_1 = arith.constant 0 : index
    %c0_2 = arith.constant 0 : index
    %3 = vector.load %arg3[%c0, %c0_1, %c0_2] : memref<1x32x96xbf16, #tpu.memory_space<vmem>>, vector<1x32x96xbf16>
    %4 = vector.shape_cast %3 : vector<1x32x96xbf16> to vector<32x96xbf16>
    %c0_3 = arith.constant 0 : index
    %c0_4 = arith.constant 0 : index
    %c0_5 = arith.constant 0 : index
    %5 = vector.load %arg4[%c0_3, %c0_4, %c0_5] : memref<1x1x96xf32, #tpu.memory_space<vmem>>, vector<1x1x96xf32>
    %6 = vector.shape_cast %5 : vector<1x1x96xf32> to vector<1x96xf32>
    %c0_6 = arith.constant 0 : index
    %c0_7 = arith.constant 0 : index
    %7 = vector.load %arg5[%c0_6, %c0_7] : memref<2x1xi32, #tpu.memory_space<vmem>>, vector<2x1xi32>
    %c8_i32 = arith.constant 8 : i32
    %8 = arith.muli %arg1, %c8_i32 : i32
    %c0_8 = arith.constant 0 : index
    %c0_9 = arith.constant 0 : index
    %9 = vector.load %arg8[%c0_8, %c0_9] : memref<2x32xf32, #tpu.memory_space<vmem>>, vector<2x32xf32>
    %c0_i32_10 = arith.constant 0 : i32
    %10 = arith.addi %8, %c0_i32_10 : i32
    %c2_i32 = arith.constant 2 : i32
    %11 = arith.muli %c2_i32, %c0_i32_10 : i32
    %c7_i32 = arith.constant 7 : i32
    %12 = arith.subi %c7_i32, %11 : i32
    %13 = arith.muli %arg0, %12 : i32
    %14 = arith.addi %c0_i32_10, %13 : i32
    %c2_i32_11 = arith.constant 2 : i32
    %15 = arith.muli %c2_i32_11, %10 : i32
    %c7_i32_12 = arith.constant 7 : i32
    %16 = arith.subi %c7_i32_12, %15 : i32
    %17 = arith.muli %arg0, %16 : i32
    %18 = arith.addi %10, %17 : i32
    %c0_13 = arith.constant 0 : index
    %19 = arith.index_cast %14 : i32 to index
    %c0_14 = arith.constant 0 : index
    %c0_15 = arith.constant 0 : index
    %20 = vector.load %arg2[%c0_13, %19, %c0_14, %c0_15] : memref<1x8x2x96xbf16, #tpu.memory_space<vmem>>, vector<1x1x2x96xbf16>
    %21 = vector.shape_cast %20 : vector<1x1x2x96xbf16> to vector<2x96xbf16>
    %22 = arith.extf %21 : vector<2x96xbf16> to vector<2x96xf32>
    %23 = arith.truncf %9 : vector<2x32xf32> to vector<2x32xbf16>
    %cst = arith.constant dense<0.000000e+00> : vector<2x96xf32>
    %24 = tpu.matmul %23, %4, %cst {dimension_numbers = #tpu.dot_dimension_numbers<[1], [0], [0], [1], [0, 0, 1, 1], [], []>} : vector<2x32xbf16>, vector<32x96xbf16>, vector<2x96xf32> -> vector<2x96xf32>
    %25 = vector.broadcast %6 : vector<1x96xf32> to vector<2x96xf32>
    %26 = arith.addf %24, %25 : vector<2x96xf32>
    %27 = vector.extract_strided_slice %22 {offsets = [0, 0], sizes = [2, 64], strides = [1, 1]} : vector<2x96xf32> to vector<2x64xf32>
    %28 = vector.extract_strided_slice %26 {offsets = [0, 0], sizes = [2, 64], strides = [1, 1]} : vector<2x96xf32> to vector<2x64xf32>
    %29 = arith.addf %27, %28 : vector<2x64xf32>
    %30 = arith.negf %29 : vector<2x64xf32>
    %31 = math.exp %30 : vector<2x64xf32>
    %cst_16 = arith.constant 1.000000e+00 : f32
    %32 = vector.broadcast %cst_16 : f32 to vector<2x64xf32>
    %33 = arith.addf %32, %31 : vector<2x64xf32>
    %34 = arith.divf %32, %33 : vector<2x64xf32>
    %35 = vector.extract_strided_slice %34 {offsets = [0, 0], sizes = [2, 32], strides = [1, 1]} : vector<2x64xf32> to vector<2x32xf32>
    %36 = vector.extract_strided_slice %34 {offsets = [0, 32], sizes = [2, 32], strides = [1, 1]} : vector<2x64xf32> to vector<2x32xf32>
    %37 = vector.extract_strided_slice %22 {offsets = [0, 64], sizes = [2, 32], strides = [1, 1]} : vector<2x96xf32> to vector<2x32xf32>
    %38 = vector.extract_strided_slice %26 {offsets = [0, 64], sizes = [2, 32], strides = [1, 1]} : vector<2x96xf32> to vector<2x32xf32>
    %39 = arith.mulf %35, %38 : vector<2x32xf32>
    %40 = arith.addf %37, %39 : vector<2x32xf32>
    %41 = math.tanh %40 : vector<2x32xf32>
    %cst_17 = arith.constant 1.000000e+00 : f32
    %42 = vector.broadcast %cst_17 : f32 to vector<2x32xf32>
    %43 = arith.subf %42, %36 : vector<2x32xf32>
    %44 = arith.mulf %43, %41 : vector<2x32xf32>
    %45 = arith.mulf %36, %9 : vector<2x32xf32>
    %46 = arith.addf %44, %45 : vector<2x32xf32>
    %47 = vector.broadcast %18 : i32 to vector<2x1xi32>
    %48 = arith.cmpi slt, %47, %7 : vector<2x1xi32>
    %cst_18 = arith.constant 0.000000e+00 : f32
    %49 = vector.shape_cast %48 : vector<2x1xi1> to vector<2x1xi1>
    %50 = vector.broadcast %49 : vector<2x1xi1> to vector<2x32xi1>
    %51 = vector.broadcast %cst_18 : f32 to vector<2x32xf32>
    %52 = arith.select %50, %46, %51 : vector<2x32xi1>, vector<2x32xf32>
    %c0_19 = arith.constant 0 : index
    %53 = arith.index_cast %14 : i32 to index
    %c0_20 = arith.constant 0 : index
    %c0_21 = arith.constant 0 : index
    %54 = vector.load %arg6[%c0_19, %53, %c0_20, %c0_21] : memref<1x8x2x32xf32, #tpu.memory_space<vmem>>, vector<1x1x2x32xf32>
    %55 = vector.shape_cast %54 : vector<1x1x2x32xf32> to vector<2x32xf32>
    %56 = vector.shape_cast %52 : vector<2x32xf32> to vector<1x1x2x32xf32>
    tpu.vector_store %arg6[%c0_19, %53, %c0_20, %c0_21], %56 {strides = array<i32>} : memref<1x8x2x32xf32, #tpu.memory_space<vmem>>, vector<1x1x2x32xf32>,
    %57 = vector.shape_cast %48 : vector<2x1xi1> to vector<2x1xi1>
    %58 = vector.broadcast %57 : vector<2x1xi1> to vector<2x32xi1>
    %59 = arith.select %58, %46, %9 : vector<2x32xi1>, vector<2x32xf32>
    %c1_i32 = arith.constant 1 : i32
    %60 = arith.addi %8, %c1_i32 : i32
    %c2_i32_22 = arith.constant 2 : i32
    %61 = arith.muli %c2_i32_22, %c1_i32 : i32
    %c7_i32_23 = arith.constant 7 : i32
    %62 = arith.subi %c7_i32_23, %61 : i32
    %63 = arith.muli %arg0, %62 : i32
    %64 = arith.addi %c1_i32, %63 : i32
    %c2_i32_24 = arith.constant 2 : i32
    %65 = arith.muli %c2_i32_24, %60 : i32
    %c7_i32_25 = arith.constant 7 : i32
    %66 = arith.subi %c7_i32_25, %65 : i32
    %67 = arith.muli %arg0, %66 : i32
    %68 = arith.addi %60, %67 : i32
    %c0_26 = arith.constant 0 : index
    %69 = arith.index_cast %64 : i32 to index
    %c0_27 = arith.constant 0 : index
    %c0_28 = arith.constant 0 : index
    %70 = vector.load %arg2[%c0_26, %69, %c0_27, %c0_28] : memref<1x8x2x96xbf16, #tpu.memory_space<vmem>>, vector<1x1x2x96xbf16>
    %71 = vector.shape_cast %70 : vector<1x1x2x96xbf16> to vector<2x96xbf16>
    %72 = arith.extf %71 : vector<2x96xbf16> to vector<2x96xf32>
    %73 = arith.truncf %59 : vector<2x32xf32> to vector<2x32xbf16>
    %cst_29 = arith.constant dense<0.000000e+00> : vector<2x96xf32>
    %74 = tpu.matmul %73, %4, %cst_29 {dimension_numbers = #tpu.dot_dimension_numbers<[1], [0], [0], [1], [0, 0, 1, 1], [], []>} : vector<2x32xbf16>, vector<32x96xbf16>, vector<2x96xf32> -> vector<2x96xf32>
    %75 = vector.broadcast %6 : vector<1x96xf32> to vector<2x96xf32>
    %76 = arith.addf %74, %75 : vector<2x96xf32>
    %77 = vector.extract_strided_slice %72 {offsets = [0, 0], sizes = [2, 64], strides = [1, 1]} : vector<2x96xf32> to vector<2x64xf32>
    %78 = vector.extract_strided_slice %76 {offsets = [0, 0], sizes = [2, 64], strides = [1, 1]} : vector<2x96xf32> to vector<2x64xf32>
    %79 = arith.addf %77, %78 : vector<2x64xf32>
    %80 = arith.negf %79 : vector<2x64xf32>
    %81 = math.exp %80 : vector<2x64xf32>
    %cst_30 = arith.constant 1.000000e+00 : f32
    %82 = vector.broadcast %cst_30 : f32 to vector<2x64xf32>
    %83 = arith.addf %82, %81 : vector<2x64xf32>
    %84 = arith.divf %82, %83 : vector<2x64xf32>
    %85 = vector.extract_strided_slice %84 {offsets = [0, 0], sizes = [2, 32], strides = [1, 1]} : vector<2x64xf32> to vector<2x32xf32>
    %86 = vector.extract_strided_slice %84 {offsets = [0, 32], sizes = [2, 32], strides = [1, 1]} : vector<2x64xf32> to vector<2x32xf32>
    %87 = vector.extract_strided_slice %72 {offsets = [0, 64], sizes = [2, 32], strides = [1, 1]} : vector<2x96xf32> to vector<2x32xf32>
    %88 = vector.extract_strided_slice %76 {offsets = [0, 64], sizes = [2, 32], strides = [1, 1]} : vector<2x96xf32> to vector<2x32xf32>
    %89 = arith.mulf %85, %88 : vector<2x32xf32>
    %90 = arith.addf %87, %89 : vector<2x32xf32>
    %91 = math.tanh %90 : vector<2x32xf32>
    %cst_31 = arith.constant 1.000000e+00 : f32
    %92 = vector.broadcast %cst_31 : f32 to vector<2x32xf32>
    %93 = arith.subf %92, %86 : vector<2x32xf32>
    %94 = arith.mulf %93, %91 : vector<2x32xf32>
    %95 = arith.mulf %86, %59 : vector<2x32xf32>
    %96 = arith.addf %94, %95 : vector<2x32xf32>
    %97 = vector.broadcast %68 : i32 to vector<2x1xi32>
    %98 = arith.cmpi slt, %97, %7 : vector<2x1xi32>
    %cst_32 = arith.constant 0.000000e+00 : f32
    %99 = vector.shape_cast %98 : vector<2x1xi1> to vector<2x1xi1>
    %100 = vector.broadcast %99 : vector<2x1xi1> to vector<2x32xi1>
    %101 = vector.broadcast %cst_32 : f32 to vector<2x32xf32>
    %102 = arith.select %100, %96, %101 : vector<2x32xi1>, vector<2x32xf32>
    %c0_33 = arith.constant 0 : index
    %103 = arith.index_cast %64 : i32 to index
    %c0_34 = arith.constant 0 : index
    %c0_35 = arith.constant 0 : index
    %104 = vector.load %arg6[%c0_33, %103, %c0_34, %c0_35] : memref<1x8x2x32xf32, #tpu.memory_space<vmem>>, vector<1x1x2x32xf32>
    %105 = vector.shape_cast %104 : vector<1x1x2x32xf32> to vector<2x32xf32>
    %106 = vector.shape_cast %102 : vector<2x32xf32> to vector<1x1x2x32xf32>
    tpu.vector_store %arg6[%c0_33, %103, %c0_34, %c0_35], %106 {strides = array<i32>} : memref<1x8x2x32xf32, #tpu.memory_space<vmem>>, vector<1x1x2x32xf32>,
    %107 = vector.shape_cast %98 : vector<2x1xi1> to vector<2x1xi1>
    %108 = vector.broadcast %107 : vector<2x1xi1> to vector<2x32xi1>
    %109 = arith.select %108, %96, %59 : vector<2x32xi1>, vector<2x32xf32>
    %c2_i32_36 = arith.constant 2 : i32
    %110 = arith.addi %8, %c2_i32_36 : i32
    %c2_i32_37 = arith.constant 2 : i32
    %111 = arith.muli %c2_i32_37, %c2_i32_36 : i32
    %c7_i32_38 = arith.constant 7 : i32
    %112 = arith.subi %c7_i32_38, %111 : i32
    %113 = arith.muli %arg0, %112 : i32
    %114 = arith.addi %c2_i32_36, %113 : i32
    %c2_i32_39 = arith.constant 2 : i32
    %115 = arith.muli %c2_i32_39, %110 : i32
    %c7_i32_40 = arith.constant 7 : i32
    %116 = arith.subi %c7_i32_40, %115 : i32
    %117 = arith.muli %arg0, %116 : i32
    %118 = arith.addi %110, %117 : i32
    %c0_41 = arith.constant 0 : index
    %119 = arith.index_cast %114 : i32 to index
    %c0_42 = arith.constant 0 : index
    %c0_43 = arith.constant 0 : index
    %120 = vector.load %arg2[%c0_41, %119, %c0_42, %c0_43] : memref<1x8x2x96xbf16, #tpu.memory_space<vmem>>, vector<1x1x2x96xbf16>
    %121 = vector.shape_cast %120 : vector<1x1x2x96xbf16> to vector<2x96xbf16>
    %122 = arith.extf %121 : vector<2x96xbf16> to vector<2x96xf32>
    %123 = arith.truncf %109 : vector<2x32xf32> to vector<2x32xbf16>
    %cst_44 = arith.constant dense<0.000000e+00> : vector<2x96xf32>
    %124 = tpu.matmul %123, %4, %cst_44 {dimension_numbers = #tpu.dot_dimension_numbers<[1], [0], [0], [1], [0, 0, 1, 1], [], []>} : vector<2x32xbf16>, vector<32x96xbf16>, vector<2x96xf32> -> vector<2x96xf32>
    %125 = vector.broadcast %6 : vector<1x96xf32> to vector<2x96xf32>
    %126 = arith.addf %124, %125 : vector<2x96xf32>
    %127 = vector.extract_strided_slice %122 {offsets = [0, 0], sizes = [2, 64], strides = [1, 1]} : vector<2x96xf32> to vector<2x64xf32>
    %128 = vector.extract_strided_slice %126 {offsets = [0, 0], sizes = [2, 64], strides = [1, 1]} : vector<2x96xf32> to vector<2x64xf32>
    %129 = arith.addf %127, %128 : vector<2x64xf32>
    %130 = arith.negf %129 : vector<2x64xf32>
    %131 = math.exp %130 : vector<2x64xf32>
    %cst_45 = arith.constant 1.000000e+00 : f32
    %132 = vector.broadcast %cst_45 : f32 to vector<2x64xf32>
    %133 = arith.addf %132, %131 : vector<2x64xf32>
    %134 = arith.divf %132, %133 : vector<2x64xf32>
    %135 = vector.extract_strided_slice %134 {offsets = [0, 0], sizes = [2, 32], strides = [1, 1]} : vector<2x64xf32> to vector<2x32xf32>
    %136 = vector.extract_strided_slice %134 {offsets = [0, 32], sizes = [2, 32], strides = [1, 1]} : vector<2x64xf32> to vector<2x32xf32>
    %137 = vector.extract_strided_slice %122 {offsets = [0, 64], sizes = [2, 32], strides = [1, 1]} : vector<2x96xf32> to vector<2x32xf32>
    %138 = vector.extract_strided_slice %126 {offsets = [0, 64], sizes = [2, 32], strides = [1, 1]} : vector<2x96xf32> to vector<2x32xf32>
    %139 = arith.mulf %135, %138 : vector<2x32xf32>
    %140 = arith.addf %137, %139 : vector<2x32xf32>
    %141 = math.tanh %140 : vector<2x32xf32>
    %cst_46 = arith.constant 1.000000e+00 : f32
    %142 = vector.broadcast %cst_46 : f32 to vector<2x32xf32>
    %143 = arith.subf %142, %136 : vector<2x32xf32>
    %144 = arith.mulf %143, %141 : vector<2x32xf32>
    %145 = arith.mulf %136, %109 : vector<2x32xf32>
    %146 = arith.addf %144, %145 : vector<2x32xf32>
    %147 = vector.broadcast %118 : i32 to vector<2x1xi32>
    %148 = arith.cmpi slt, %147, %7 : vector<2x1xi32>
    %cst_47 = arith.constant 0.000000e+00 : f32
    %149 = vector.shape_cast %148 : vector<2x1xi1> to vector<2x1xi1>
    %150 = vector.broadcast %149 : vector<2x1xi1> to vector<2x32xi1>
    %151 = vector.broadcast %cst_47 : f32 to vector<2x32xf32>
    %152 = arith.select %150, %146, %151 : vector<2x32xi1>, vector<2x32xf32>
    %c0_48 = arith.constant 0 : index
    %153 = arith.index_cast %114 : i32 to index
    %c0_49 = arith.constant 0 : index
    %c0_50 = arith.constant 0 : index
    %154 = vector.load %arg6[%c0_48, %153, %c0_49, %c0_50] : memref<1x8x2x32xf32, #tpu.memory_space<vmem>>, vector<1x1x2x32xf32>
    %155 = vector.shape_cast %154 : vector<1x1x2x32xf32> to vector<2x32xf32>
    %156 = vector.shape_cast %152 : vector<2x32xf32> to vector<1x1x2x32xf32>
    tpu.vector_store %arg6[%c0_48, %153, %c0_49, %c0_50], %156 {strides = array<i32>} : memref<1x8x2x32xf32, #tpu.memory_space<vmem>>, vector<1x1x2x32xf32>,
    %157 = vector.shape_cast %148 : vector<2x1xi1> to vector<2x1xi1>
    %158 = vector.broadcast %157 : vector<2x1xi1> to vector<2x32xi1>
    %159 = arith.select %158, %146, %109 : vector<2x32xi1>, vector<2x32xf32>
    %c3_i32 = arith.constant 3 : i32
    %160 = arith.addi %8, %c3_i32 : i32
    %c2_i32_51 = arith.constant 2 : i32
    %161 = arith.muli %c2_i32_51, %c3_i32 : i32
    %c7_i32_52 = arith.constant 7 : i32
    %162 = arith.subi %c7_i32_52, %161 : i32
    %163 = arith.muli %arg0, %162 : i32
    %164 = arith.addi %c3_i32, %163 : i32
    %c2_i32_53 = arith.constant 2 : i32
    %165 = arith.muli %c2_i32_53, %160 : i32
    %c7_i32_54 = arith.constant 7 : i32
    %166 = arith.subi %c7_i32_54, %165 : i32
    %167 = arith.muli %arg0, %166 : i32
    %168 = arith.addi %160, %167 : i32
    %c0_55 = arith.constant 0 : index
    %169 = arith.index_cast %164 : i32 to index
    %c0_56 = arith.constant 0 : index
    %c0_57 = arith.constant 0 : index
    %170 = vector.load %arg2[%c0_55, %169, %c0_56, %c0_57] : memref<1x8x2x96xbf16, #tpu.memory_space<vmem>>, vector<1x1x2x96xbf16>
    %171 = vector.shape_cast %170 : vector<1x1x2x96xbf16> to vector<2x96xbf16>
    %172 = arith.extf %171 : vector<2x96xbf16> to vector<2x96xf32>
    %173 = arith.truncf %159 : vector<2x32xf32> to vector<2x32xbf16>
    %cst_58 = arith.constant dense<0.000000e+00> : vector<2x96xf32>
    %174 = tpu.matmul %173, %4, %cst_58 {dimension_numbers = #tpu.dot_dimension_numbers<[1], [0], [0], [1], [0, 0, 1, 1], [], []>} : vector<2x32xbf16>, vector<32x96xbf16>, vector<2x96xf32> -> vector<2x96xf32>
    %175 = vector.broadcast %6 : vector<1x96xf32> to vector<2x96xf32>
    %176 = arith.addf %174, %175 : vector<2x96xf32>
    %177 = vector.extract_strided_slice %172 {offsets = [0, 0], sizes = [2, 64], strides = [1, 1]} : vector<2x96xf32> to vector<2x64xf32>
    %178 = vector.extract_strided_slice %176 {offsets = [0, 0], sizes = [2, 64], strides = [1, 1]} : vector<2x96xf32> to vector<2x64xf32>
    %179 = arith.addf %177, %178 : vector<2x64xf32>
    %180 = arith.negf %179 : vector<2x64xf32>
    %181 = math.exp %180 : vector<2x64xf32>
    %cst_59 = arith.constant 1.000000e+00 : f32
    %182 = vector.broadcast %cst_59 : f32 to vector<2x64xf32>
    %183 = arith.addf %182, %181 : vector<2x64xf32>
    %184 = arith.divf %182, %183 : vector<2x64xf32>
    %185 = vector.extract_strided_slice %184 {offsets = [0, 0], sizes = [2, 32], strides = [1, 1]} : vector<2x64xf32> to vector<2x32xf32>
    %186 = vector.extract_strided_slice %184 {offsets = [0, 32], sizes = [2, 32], strides = [1, 1]} : vector<2x64xf32> to vector<2x32xf32>
    %187 = vector.extract_strided_slice %172 {offsets = [0, 64], sizes = [2, 32], strides = [1, 1]} : vector<2x96xf32> to vector<2x32xf32>
    %188 = vector.extract_strided_slice %176 {offsets = [0, 64], sizes = [2, 32], strides = [1, 1]} : vector<2x96xf32> to vector<2x32xf32>
    %189 = arith.mulf %185, %188 : vector<2x32xf32>
    %190 = arith.addf %187, %189 : vector<2x32xf32>
    %191 = math.tanh %190 : vector<2x32xf32>
    %cst_60 = arith.constant 1.000000e+00 : f32
    %192 = vector.broadcast %cst_60 : f32 to vector<2x32xf32>
    %193 = arith.subf %192, %186 : vector<2x32xf32>
    %194 = arith.mulf %193, %191 : vector<2x32xf32>
    %195 = arith.mulf %186, %159 : vector<2x32xf32>
    %196 = arith.addf %194, %195 : vector<2x32xf32>
    %197 = vector.broadcast %168 : i32 to vector<2x1xi32>
    %198 = arith.cmpi slt, %197, %7 : vector<2x1xi32>
    %cst_61 = arith.constant 0.000000e+00 : f32
    %199 = vector.shape_cast %198 : vector<2x1xi1> to vector<2x1xi1>
    %200 = vector.broadcast %199 : vector<2x1xi1> to vector<2x32xi1>
    %201 = vector.broadcast %cst_61 : f32 to vector<2x32xf32>
    %202 = arith.select %200, %196, %201 : vector<2x32xi1>, vector<2x32xf32>
    %c0_62 = arith.constant 0 : index
    %203 = arith.index_cast %164 : i32 to index
    %c0_63 = arith.constant 0 : index
    %c0_64 = arith.constant 0 : index
    %204 = vector.load %arg6[%c0_62, %203, %c0_63, %c0_64] : memref<1x8x2x32xf32, #tpu.memory_space<vmem>>, vector<1x1x2x32xf32>
    %205 = vector.shape_cast %204 : vector<1x1x2x32xf32> to vector<2x32xf32>
    %206 = vector.shape_cast %202 : vector<2x32xf32> to vector<1x1x2x32xf32>
    tpu.vector_store %arg6[%c0_62, %203, %c0_63, %c0_64], %206 {strides = array<i32>} : memref<1x8x2x32xf32, #tpu.memory_space<vmem>>, vector<1x1x2x32xf32>,
    %207 = vector.shape_cast %198 : vector<2x1xi1> to vector<2x1xi1>
    %208 = vector.broadcast %207 : vector<2x1xi1> to vector<2x32xi1>
    %209 = arith.select %208, %196, %159 : vector<2x32xi1>, vector<2x32xf32>
    %c4_i32 = arith.constant 4 : i32
    %210 = arith.addi %8, %c4_i32 : i32
    %c2_i32_65 = arith.constant 2 : i32
    %211 = arith.muli %c2_i32_65, %c4_i32 : i32
    %c7_i32_66 = arith.constant 7 : i32
    %212 = arith.subi %c7_i32_66, %211 : i32
    %213 = arith.muli %arg0, %212 : i32
    %214 = arith.addi %c4_i32, %213 : i32
    %c2_i32_67 = arith.constant 2 : i32
    %215 = arith.muli %c2_i32_67, %210 : i32
    %c7_i32_68 = arith.constant 7 : i32
    %216 = arith.subi %c7_i32_68, %215 : i32
    %217 = arith.muli %arg0, %216 : i32
    %218 = arith.addi %210, %217 : i32
    %c0_69 = arith.constant 0 : index
    %219 = arith.index_cast %214 : i32 to index
    %c0_70 = arith.constant 0 : index
    %c0_71 = arith.constant 0 : index
    %220 = vector.load %arg2[%c0_69, %219, %c0_70, %c0_71] : memref<1x8x2x96xbf16, #tpu.memory_space<vmem>>, vector<1x1x2x96xbf16>
    %221 = vector.shape_cast %220 : vector<1x1x2x96xbf16> to vector<2x96xbf16>
    %222 = arith.extf %221 : vector<2x96xbf16> to vector<2x96xf32>
    %223 = arith.truncf %209 : vector<2x32xf32> to vector<2x32xbf16>
    %cst_72 = arith.constant dense<0.000000e+00> : vector<2x96xf32>
    %224 = tpu.matmul %223, %4, %cst_72 {dimension_numbers = #tpu.dot_dimension_numbers<[1], [0], [0], [1], [0, 0, 1, 1], [], []>} : vector<2x32xbf16>, vector<32x96xbf16>, vector<2x96xf32> -> vector<2x96xf32>
    %225 = vector.broadcast %6 : vector<1x96xf32> to vector<2x96xf32>
    %226 = arith.addf %224, %225 : vector<2x96xf32>
    %227 = vector.extract_strided_slice %222 {offsets = [0, 0], sizes = [2, 64], strides = [1, 1]} : vector<2x96xf32> to vector<2x64xf32>
    %228 = vector.extract_strided_slice %226 {offsets = [0, 0], sizes = [2, 64], strides = [1, 1]} : vector<2x96xf32> to vector<2x64xf32>
    %229 = arith.addf %227, %228 : vector<2x64xf32>
    %230 = arith.negf %229 : vector<2x64xf32>
    %231 = math.exp %230 : vector<2x64xf32>
    %cst_73 = arith.constant 1.000000e+00 : f32
    %232 = vector.broadcast %cst_73 : f32 to vector<2x64xf32>
    %233 = arith.addf %232, %231 : vector<2x64xf32>
    %234 = arith.divf %232, %233 : vector<2x64xf32>
    %235 = vector.extract_strided_slice %234 {offsets = [0, 0], sizes = [2, 32], strides = [1, 1]} : vector<2x64xf32> to vector<2x32xf32>
    %236 = vector.extract_strided_slice %234 {offsets = [0, 32], sizes = [2, 32], strides = [1, 1]} : vector<2x64xf32> to vector<2x32xf32>
    %237 = vector.extract_strided_slice %222 {offsets = [0, 64], sizes = [2, 32], strides = [1, 1]} : vector<2x96xf32> to vector<2x32xf32>
    %238 = vector.extract_strided_slice %226 {offsets = [0, 64], sizes = [2, 32], strides = [1, 1]} : vector<2x96xf32> to vector<2x32xf32>
    %239 = arith.mulf %235, %238 : vector<2x32xf32>
    %240 = arith.addf %237, %239 : vector<2x32xf32>
    %241 = math.tanh %240 : vector<2x32xf32>
    %cst_74 = arith.constant 1.000000e+00 : f32
    %242 = vector.broadcast %cst_74 : f32 to vector<2x32xf32>
    %243 = arith.subf %242, %236 : vector<2x32xf32>
    %244 = arith.mulf %243, %241 : vector<2x32xf32>
    %245 = arith.mulf %236, %209 : vector<2x32xf32>
    %246 = arith.addf %244, %245 : vector<2x32xf32>
    %247 = vector.broadcast %218 : i32 to vector<2x1xi32>
    %248 = arith.cmpi slt, %247, %7 : vector<2x1xi32>
    %cst_75 = arith.constant 0.000000e+00 : f32
    %249 = vector.shape_cast %248 : vector<2x1xi1> to vector<2x1xi1>
    %250 = vector.broadcast %249 : vector<2x1xi1> to vector<2x32xi1>
    %251 = vector.broadcast %cst_75 : f32 to vector<2x32xf32>
    %252 = arith.select %250, %246, %251 : vector<2x32xi1>, vector<2x32xf32>
    %c0_76 = arith.constant 0 : index
    %253 = arith.index_cast %214 : i32 to index
    %c0_77 = arith.constant 0 : index
    %c0_78 = arith.constant 0 : index
    %254 = vector.load %arg6[%c0_76, %253, %c0_77, %c0_78] : memref<1x8x2x32xf32, #tpu.memory_space<vmem>>, vector<1x1x2x32xf32>
    %255 = vector.shape_cast %254 : vector<1x1x2x32xf32> to vector<2x32xf32>
    %256 = vector.shape_cast %252 : vector<2x32xf32> to vector<1x1x2x32xf32>
    tpu.vector_store %arg6[%c0_76, %253, %c0_77, %c0_78], %256 {strides = array<i32>} : memref<1x8x2x32xf32, #tpu.memory_space<vmem>>, vector<1x1x2x32xf32>,
    %257 = vector.shape_cast %248 : vector<2x1xi1> to vector<2x1xi1>
    %258 = vector.broadcast %257 : vector<2x1xi1> to vector<2x32xi1>
    %259 = arith.select %258, %246, %209 : vector<2x32xi1>, vector<2x32xf32>
    %c5_i32 = arith.constant 5 : i32
    %260 = arith.addi %8, %c5_i32 : i32
    %c2_i32_79 = arith.constant 2 : i32
    %261 = arith.muli %c2_i32_79, %c5_i32 : i32
    %c7_i32_80 = arith.constant 7 : i32
    %262 = arith.subi %c7_i32_80, %261 : i32
    %263 = arith.muli %arg0, %262 : i32
    %264 = arith.addi %c5_i32, %263 : i32
    %c2_i32_81 = arith.constant 2 : i32
    %265 = arith.muli %c2_i32_81, %260 : i32
    %c7_i32_82 = arith.constant 7 : i32
    %266 = arith.subi %c7_i32_82, %265 : i32
    %267 = arith.muli %arg0, %266 : i32
    %268 = arith.addi %260, %267 : i32
    %c0_83 = arith.constant 0 : index
    %269 = arith.index_cast %264 : i32 to index
    %c0_84 = arith.constant 0 : index
    %c0_85 = arith.constant 0 : index
    %270 = vector.load %arg2[%c0_83, %269, %c0_84, %c0_85] : memref<1x8x2x96xbf16, #tpu.memory_space<vmem>>, vector<1x1x2x96xbf16>
    %271 = vector.shape_cast %270 : vector<1x1x2x96xbf16> to vector<2x96xbf16>
    %272 = arith.extf %271 : vector<2x96xbf16> to vector<2x96xf32>
    %273 = arith.truncf %259 : vector<2x32xf32> to vector<2x32xbf16>
    %cst_86 = arith.constant dense<0.000000e+00> : vector<2x96xf32>
    %274 = tpu.matmul %273, %4, %cst_86 {dimension_numbers = #tpu.dot_dimension_numbers<[1], [0], [0], [1], [0, 0, 1, 1], [], []>} : vector<2x32xbf16>, vector<32x96xbf16>, vector<2x96xf32> -> vector<2x96xf32>
    %275 = vector.broadcast %6 : vector<1x96xf32> to vector<2x96xf32>
    %276 = arith.addf %274, %275 : vector<2x96xf32>
    %277 = vector.extract_strided_slice %272 {offsets = [0, 0], sizes = [2, 64], strides = [1, 1]} : vector<2x96xf32> to vector<2x64xf32>
    %278 = vector.extract_strided_slice %276 {offsets = [0, 0], sizes = [2, 64], strides = [1, 1]} : vector<2x96xf32> to vector<2x64xf32>
    %279 = arith.addf %277, %278 : vector<2x64xf32>
    %280 = arith.negf %279 : vector<2x64xf32>
    %281 = math.exp %280 : vector<2x64xf32>
    %cst_87 = arith.constant 1.000000e+00 : f32
    %282 = vector.broadcast %cst_87 : f32 to vector<2x64xf32>
    %283 = arith.addf %282, %281 : vector<2x64xf32>
    %284 = arith.divf %282, %283 : vector<2x64xf32>
    %285 = vector.extract_strided_slice %284 {offsets = [0, 0], sizes = [2, 32], strides = [1, 1]} : vector<2x64xf32> to vector<2x32xf32>
    %286 = vector.extract_strided_slice %284 {offsets = [0, 32], sizes = [2, 32], strides = [1, 1]} : vector<2x64xf32> to vector<2x32xf32>
    %287 = vector.extract_strided_slice %272 {offsets = [0, 64], sizes = [2, 32], strides = [1, 1]} : vector<2x96xf32> to vector<2x32xf32>
    %288 = vector.extract_strided_slice %276 {offsets = [0, 64], sizes = [2, 32], strides = [1, 1]} : vector<2x96xf32> to vector<2x32xf32>
    %289 = arith.mulf %285, %288 : vector<2x32xf32>
    %290 = arith.addf %287, %289 : vector<2x32xf32>
    %291 = math.tanh %290 : vector<2x32xf32>
    %cst_88 = arith.constant 1.000000e+00 : f32
    %292 = vector.broadcast %cst_88 : f32 to vector<2x32xf32>
    %293 = arith.subf %292, %286 : vector<2x32xf32>
    %294 = arith.mulf %293, %291 : vector<2x32xf32>
    %295 = arith.mulf %286, %259 : vector<2x32xf32>
    %296 = arith.addf %294, %295 : vector<2x32xf32>
    %297 = vector.broadcast %268 : i32 to vector<2x1xi32>
    %298 = arith.cmpi slt, %297, %7 : vector<2x1xi32>
    %cst_89 = arith.constant 0.000000e+00 : f32
    %299 = vector.shape_cast %298 : vector<2x1xi1> to vector<2x1xi1>
    %300 = vector.broadcast %299 : vector<2x1xi1> to vector<2x32xi1>
    %301 = vector.broadcast %cst_89 : f32 to vector<2x32xf32>
    %302 = arith.select %300, %296, %301 : vector<2x32xi1>, vector<2x32xf32>
    %c0_90 = arith.constant 0 : index
    %303 = arith.index_cast %264 : i32 to index
    %c0_91 = arith.constant 0 : index
    %c0_92 = arith.constant 0 : index
    %304 = vector.load %arg6[%c0_90, %303, %c0_91, %c0_92] : memref<1x8x2x32xf32, #tpu.memory_space<vmem>>, vector<1x1x2x32xf32>
    %305 = vector.shape_cast %304 : vector<1x1x2x32xf32> to vector<2x32xf32>
    %306 = vector.shape_cast %302 : vector<2x32xf32> to vector<1x1x2x32xf32>
    tpu.vector_store %arg6[%c0_90, %303, %c0_91, %c0_92], %306 {strides = array<i32>} : memref<1x8x2x32xf32, #tpu.memory_space<vmem>>, vector<1x1x2x32xf32>,
    %307 = vector.shape_cast %298 : vector<2x1xi1> to vector<2x1xi1>
    %308 = vector.broadcast %307 : vector<2x1xi1> to vector<2x32xi1>
    %309 = arith.select %308, %296, %259 : vector<2x32xi1>, vector<2x32xf32>
    %c6_i32 = arith.constant 6 : i32
    %310 = arith.addi %8, %c6_i32 : i32
    %c2_i32_93 = arith.constant 2 : i32
    %311 = arith.muli %c2_i32_93, %c6_i32 : i32
    %c7_i32_94 = arith.constant 7 : i32
    %312 = arith.subi %c7_i32_94, %311 : i32
    %313 = arith.muli %arg0, %312 : i32
    %314 = arith.addi %c6_i32, %313 : i32
    %c2_i32_95 = arith.constant 2 : i32
    %315 = arith.muli %c2_i32_95, %310 : i32
    %c7_i32_96 = arith.constant 7 : i32
    %316 = arith.subi %c7_i32_96, %315 : i32
    %317 = arith.muli %arg0, %316 : i32
    %318 = arith.addi %310, %317 : i32
    %c0_97 = arith.constant 0 : index
    %319 = arith.index_cast %314 : i32 to index
    %c0_98 = arith.constant 0 : index
    %c0_99 = arith.constant 0 : index
    %320 = vector.load %arg2[%c0_97, %319, %c0_98, %c0_99] : memref<1x8x2x96xbf16, #tpu.memory_space<vmem>>, vector<1x1x2x96xbf16>
    %321 = vector.shape_cast %320 : vector<1x1x2x96xbf16> to vector<2x96xbf16>
    %322 = arith.extf %321 : vector<2x96xbf16> to vector<2x96xf32>
    %323 = arith.truncf %309 : vector<2x32xf32> to vector<2x32xbf16>
    %cst_100 = arith.constant dense<0.000000e+00> : vector<2x96xf32>
    %324 = tpu.matmul %323, %4, %cst_100 {dimension_numbers = #tpu.dot_dimension_numbers<[1], [0], [0], [1], [0, 0, 1, 1], [], []>} : vector<2x32xbf16>, vector<32x96xbf16>, vector<2x96xf32> -> vector<2x96xf32>
    %325 = vector.broadcast %6 : vector<1x96xf32> to vector<2x96xf32>
    %326 = arith.addf %324, %325 : vector<2x96xf32>
    %327 = vector.extract_strided_slice %322 {offsets = [0, 0], sizes = [2, 64], strides = [1, 1]} : vector<2x96xf32> to vector<2x64xf32>
    %328 = vector.extract_strided_slice %326 {offsets = [0, 0], sizes = [2, 64], strides = [1, 1]} : vector<2x96xf32> to vector<2x64xf32>
    %329 = arith.addf %327, %328 : vector<2x64xf32>
    %330 = arith.negf %329 : vector<2x64xf32>
    %331 = math.exp %330 : vector<2x64xf32>
    %cst_101 = arith.constant 1.000000e+00 : f32
    %332 = vector.broadcast %cst_101 : f32 to vector<2x64xf32>
    %333 = arith.addf %332, %331 : vector<2x64xf32>
    %334 = arith.divf %332, %333 : vector<2x64xf32>
    %335 = vector.extract_strided_slice %334 {offsets = [0, 0], sizes = [2, 32], strides = [1, 1]} : vector<2x64xf32> to vector<2x32xf32>
    %336 = vector.extract_strided_slice %334 {offsets = [0, 32], sizes = [2, 32], strides = [1, 1]} : vector<2x64xf32> to vector<2x32xf32>
    %337 = vector.extract_strided_slice %322 {offsets = [0, 64], sizes = [2, 32], strides = [1, 1]} : vector<2x96xf32> to vector<2x32xf32>
    %338 = vector.extract_strided_slice %326 {offsets = [0, 64], sizes = [2, 32], strides = [1, 1]} : vector<2x96xf32> to vector<2x32xf32>
    %339 = arith.mulf %335, %338 : vector<2x32xf32>
    %340 = arith.addf %337, %339 : vector<2x32xf32>
    %341 = math.tanh %340 : vector<2x32xf32>
    %cst_102 = arith.constant 1.000000e+00 : f32
    %342 = vector.broadcast %cst_102 : f32 to vector<2x32xf32>
    %343 = arith.subf %342, %336 : vector<2x32xf32>
    %344 = arith.mulf %343, %341 : vector<2x32xf32>
    %345 = arith.mulf %336, %309 : vector<2x32xf32>
    %346 = arith.addf %344, %345 : vector<2x32xf32>
    %347 = vector.broadcast %318 : i32 to vector<2x1xi32>
    %348 = arith.cmpi slt, %347, %7 : vector<2x1xi32>
    %cst_103 = arith.constant 0.000000e+00 : f32
    %349 = vector.shape_cast %348 : vector<2x1xi1> to vector<2x1xi1>
    %350 = vector.broadcast %349 : vector<2x1xi1> to vector<2x32xi1>
    %351 = vector.broadcast %cst_103 : f32 to vector<2x32xf32>
    %352 = arith.select %350, %346, %351 : vector<2x32xi1>, vector<2x32xf32>
    %c0_104 = arith.constant 0 : index
    %353 = arith.index_cast %314 : i32 to index
    %c0_105 = arith.constant 0 : index
    %c0_106 = arith.constant 0 : index
    %354 = vector.load %arg6[%c0_104, %353, %c0_105, %c0_106] : memref<1x8x2x32xf32, #tpu.memory_space<vmem>>, vector<1x1x2x32xf32>
    %355 = vector.shape_cast %354 : vector<1x1x2x32xf32> to vector<2x32xf32>
    %356 = vector.shape_cast %352 : vector<2x32xf32> to vector<1x1x2x32xf32>
    tpu.vector_store %arg6[%c0_104, %353, %c0_105, %c0_106], %356 {strides = array<i32>} : memref<1x8x2x32xf32, #tpu.memory_space<vmem>>, vector<1x1x2x32xf32>,
    %357 = vector.shape_cast %348 : vector<2x1xi1> to vector<2x1xi1>
    %358 = vector.broadcast %357 : vector<2x1xi1> to vector<2x32xi1>
    %359 = arith.select %358, %346, %309 : vector<2x32xi1>, vector<2x32xf32>
    %c7_i32_107 = arith.constant 7 : i32
    %360 = arith.addi %8, %c7_i32_107 : i32
    %c2_i32_108 = arith.constant 2 : i32
    %361 = arith.muli %c2_i32_108, %c7_i32_107 : i32
    %c7_i32_109 = arith.constant 7 : i32
    %362 = arith.subi %c7_i32_109, %361 : i32
    %363 = arith.muli %arg0, %362 : i32
    %364 = arith.addi %c7_i32_107, %363 : i32
    %c2_i32_110 = arith.constant 2 : i32
    %365 = arith.muli %c2_i32_110, %360 : i32
    %c7_i32_111 = arith.constant 7 : i32
    %366 = arith.subi %c7_i32_111, %365 : i32
    %367 = arith.muli %arg0, %366 : i32
    %368 = arith.addi %360, %367 : i32
    %c0_112 = arith.constant 0 : index
    %369 = arith.index_cast %364 : i32 to index
    %c0_113 = arith.constant 0 : index
    %c0_114 = arith.constant 0 : index
    %370 = vector.load %arg2[%c0_112, %369, %c0_113, %c0_114] : memref<1x8x2x96xbf16, #tpu.memory_space<vmem>>, vector<1x1x2x96xbf16>
    %371 = vector.shape_cast %370 : vector<1x1x2x96xbf16> to vector<2x96xbf16>
    %372 = arith.extf %371 : vector<2x96xbf16> to vector<2x96xf32>
    %373 = arith.truncf %359 : vector<2x32xf32> to vector<2x32xbf16>
    %cst_115 = arith.constant dense<0.000000e+00> : vector<2x96xf32>
    %374 = tpu.matmul %373, %4, %cst_115 {dimension_numbers = #tpu.dot_dimension_numbers<[1], [0], [0], [1], [0, 0, 1, 1], [], []>} : vector<2x32xbf16>, vector<32x96xbf16>, vector<2x96xf32> -> vector<2x96xf32>
    %375 = vector.broadcast %6 : vector<1x96xf32> to vector<2x96xf32>
    %376 = arith.addf %374, %375 : vector<2x96xf32>
    %377 = vector.extract_strided_slice %372 {offsets = [0, 0], sizes = [2, 64], strides = [1, 1]} : vector<2x96xf32> to vector<2x64xf32>
    %378 = vector.extract_strided_slice %376 {offsets = [0, 0], sizes = [2, 64], strides = [1, 1]} : vector<2x96xf32> to vector<2x64xf32>
    %379 = arith.addf %377, %378 : vector<2x64xf32>
    %380 = arith.negf %379 : vector<2x64xf32>
    %381 = math.exp %380 : vector<2x64xf32>
    %cst_116 = arith.constant 1.000000e+00 : f32
    %382 = vector.broadcast %cst_116 : f32 to vector<2x64xf32>
    %383 = arith.addf %382, %381 : vector<2x64xf32>
    %384 = arith.divf %382, %383 : vector<2x64xf32>
    %385 = vector.extract_strided_slice %384 {offsets = [0, 0], sizes = [2, 32], strides = [1, 1]} : vector<2x64xf32> to vector<2x32xf32>
    %386 = vector.extract_strided_slice %384 {offsets = [0, 32], sizes = [2, 32], strides = [1, 1]} : vector<2x64xf32> to vector<2x32xf32>
    %387 = vector.extract_strided_slice %372 {offsets = [0, 64], sizes = [2, 32], strides = [1, 1]} : vector<2x96xf32> to vector<2x32xf32>
    %388 = vector.extract_strided_slice %376 {offsets = [0, 64], sizes = [2, 32], strides = [1, 1]} : vector<2x96xf32> to vector<2x32xf32>
    %389 = arith.mulf %385, %388 : vector<2x32xf32>
    %390 = arith.addf %387, %389 : vector<2x32xf32>
    %391 = math.tanh %390 : vector<2x32xf32>
    %cst_117 = arith.constant 1.000000e+00 : f32
    %392 = vector.broadcast %cst_117 : f32 to vector<2x32xf32>
    %393 = arith.subf %392, %386 : vector<2x32xf32>
    %394 = arith.mulf %393, %391 : vector<2x32xf32>
    %395 = arith.mulf %386, %359 : vector<2x32xf32>
    %396 = arith.addf %394, %395 : vector<2x32xf32>
    %397 = vector.broadcast %368 : i32 to vector<2x1xi32>
    %398 = arith.cmpi slt, %397, %7 : vector<2x1xi32>
    %cst_118 = arith.constant 0.000000e+00 : f32
    %399 = vector.shape_cast %398 : vector<2x1xi1> to vector<2x1xi1>
    %400 = vector.broadcast %399 : vector<2x1xi1> to vector<2x32xi1>
    %401 = vector.broadcast %cst_118 : f32 to vector<2x32xf32>
    %402 = arith.select %400, %396, %401 : vector<2x32xi1>, vector<2x32xf32>
    %c0_119 = arith.constant 0 : index
    %403 = arith.index_cast %364 : i32 to index
    %c0_120 = arith.constant 0 : index
    %c0_121 = arith.constant 0 : index
    %404 = vector.load %arg6[%c0_119, %403, %c0_120, %c0_121] : memref<1x8x2x32xf32, #tpu.memory_space<vmem>>, vector<1x1x2x32xf32>
    %405 = vector.shape_cast %404 : vector<1x1x2x32xf32> to vector<2x32xf32>
    %406 = vector.shape_cast %402 : vector<2x32xf32> to vector<1x1x2x32xf32>
    tpu.vector_store %arg6[%c0_119, %403, %c0_120, %c0_121], %406 {strides = array<i32>} : memref<1x8x2x32xf32, #tpu.memory_space<vmem>>, vector<1x1x2x32xf32>,
    %407 = vector.shape_cast %398 : vector<2x1xi1> to vector<2x1xi1>
    %408 = vector.broadcast %407 : vector<2x1xi1> to vector<2x32xi1>
    %409 = arith.select %408, %396, %359 : vector<2x32xi1>, vector<2x32xf32>
    %c8_i32_122 = arith.constant 8 : i32
    %c0_123 = arith.constant 0 : index
    %c0_124 = arith.constant 0 : index
    %410 = vector.load %arg8[%c0_123, %c0_124] : memref<2x32xf32, #tpu.memory_space<vmem>>, vector<2x32xf32>
    tpu.vector_store %arg8[%c0_123, %c0_124], %409 {strides = array<i32>} : memref<2x32xf32, #tpu.memory_space<vmem>>, vector<2x32xf32>,
    %c0_i32_125 = arith.constant 0 : i32
    %411 = arith.cmpi eq, %arg1, %c0_i32_125 : i32
    %412 = arith.extui %411 : i1 to i32
    %c0_i32_126 = arith.constant 0 : i32
    %413 = arith.cmpi ne, %412, %c0_i32_126 : i32
    scf.if %413 {
      %c0_127 = arith.constant 0 : index
      %c0_128 = arith.constant 0 : index
      %c0_129 = arith.constant 0 : index
      %414 = vector.load %arg7[%c0_127, %c0_128, %c0_129] : memref<1x2x32xf32, #tpu.memory_space<vmem>>, vector<1x2x32xf32>
      %415 = vector.shape_cast %414 : vector<1x2x32xf32> to vector<2x32xf32>
      %416 = vector.shape_cast %409 : vector<2x32xf32> to vector<1x2x32xf32>
      tpu.vector_store %arg7[%c0_127, %c0_128, %c0_129], %416 {strides = array<i32>} : memref<1x2x32xf32, #tpu.memory_space<vmem>>, vector<1x2x32xf32>,
    } else {
    }
    return
  }
  func.func @transform_0(%arg0: i32, %arg1: i32) -> (i32, i32, i32, i32) {
    %c2_i32 = arith.constant 2 : i32
    %0 = arith.muli %c2_i32, %arg1 : i32
    %c0_i32 = arith.constant 0 : i32
    %1 = arith.subi %c0_i32, %0 : i32
    %2 = arith.muli %arg0, %1 : i32
    %3 = arith.addi %arg1, %2 : i32
    %c0_i32_0 = arith.constant 0 : i32
    %c0_i32_1 = arith.constant 0 : i32
    %c0_i32_2 = arith.constant 0 : i32
    return %arg0, %3, %c0_i32_0, %c0_i32_1 : i32, i32, i32, i32
  }
  func.func @transform_1(%arg0: i32, %arg1: i32) -> (i32, i32, i32) {
    %c0_i32 = arith.constant 0 : i32
    %c0_i32_0 = arith.constant 0 : i32
    %c0_i32_1 = arith.constant 0 : i32
    return %arg0, %c0_i32, %c0_i32_0 : i32, i32, i32
  }
  func.func @transform_2(%arg0: i32, %arg1: i32) -> (i32, i32, i32) {
    %c0_i32 = arith.constant 0 : i32
    %c0_i32_0 = arith.constant 0 : i32
    %c0_i32_1 = arith.constant 0 : i32
    return %arg0, %c0_i32, %c0_i32_0 : i32, i32, i32
  }
  func.func @transform_3(%arg0: i32, %arg1: i32) -> (i32, i32) {
    %c0_i32 = arith.constant 0 : i32
    %c0_i32_0 = arith.constant 0 : i32
    %c0_i32_1 = arith.constant 0 : i32
    return %c0_i32, %c0_i32_0 : i32, i32
  }
  func.func @transform_4(%arg0: i32, %arg1: i32) -> (i32, i32, i32, i32) {
    %c2_i32 = arith.constant 2 : i32
    %0 = arith.muli %c2_i32, %arg1 : i32
    %c0_i32 = arith.constant 0 : i32
    %1 = arith.subi %c0_i32, %0 : i32
    %2 = arith.muli %arg0, %1 : i32
    %3 = arith.addi %arg1, %2 : i32
    %c0_i32_0 = arith.constant 0 : i32
    %c0_i32_1 = arith.constant 0 : i32
    %c0_i32_2 = arith.constant 0 : i32
    return %arg0, %3, %c0_i32_0, %c0_i32_1 : i32, i32, i32, i32
  }
  func.func @transform_5(%arg0: i32, %arg1: i32) -> (i32, i32, i32) {
    %c0_i32 = arith.constant 0 : i32
    %c0_i32_0 = arith.constant 0 : i32
    %c0_i32_1 = arith.constant 0 : i32
    return %arg0, %c0_i32, %c0_i32_0 : i32, i32, i32
  }
}

</mosaic_0001>

<llo_original>
// kernel: tpu_custom_call.1
$region0: #{tpu_custom_call.1}
  #allocation0 [shape = 'u32[]', space=smem, size = 0x4, offset = 0x4, fixed_abs, tag = 'smem constant byte address 0x4 - core index']
  #allocation1 [shape = 'u32[144,128]{1,0:T(1,128)}', space=vmem, size = 0x12000, scoped, tag = 'internal scratch']
  #allocation2 [shape = 'f32[2,32]{1,0:T(2,128)}', space=vmem, size = 0x400, scoped, tag = 'scratch operand']
  %s0 = inlined_call_operand.hbm [shape: bf16[2,8,2,96], index: 0, kind: input, shape index: {}]
  %s1 = inlined_call_operand.hbm [shape: bf16[2,32,96], index: 1, kind: input, shape index: {}]
  %s2 = inlined_call_operand.vmem [shape: f32[2,1,96], index: 2, kind: input, shape index: {}]
  %s3 = inlined_call_operand.vmem [shape: s32[2,1], index: 3, kind: input, shape index: {}]
  %s4 = inlined_call_operand.hbm [shape: f32[2,8,2,32], index: 4, kind: output, shape index: {0}]
  %s5 = inlined_call_operand.hbm [shape: f32[2,2,32], index: 5, kind: output, shape index: {1}]
  %6 = xla_tuple %s4, %s5
  %s7 = sld [smem:[#allocation0]]
  $region73: #{tpu_custom_call.1} parent=0
    _
  %s9 = ssub.s32 1, %s7
  %s10 = scalar_select 0, %s9, %s7
  $region1: #{tpu_custom_call.1} parent=0
    #allocation3 [shape = 'u8[8192]{0}', space=vmem, size = 0x2000, scoped, tag = 'input window, operand 0']
    #allocation4 [shape = 's32[2]{0}', space=sflag, size = 0x8, scoped, tag = 'scoped memory for tpu_custom_call.1']
    #allocation5 [shape = 's32[2]{0}', space=sflag, size = 0x8, scoped, tag = 'scoped memory for tpu_custom_call.1']
    #allocation6 [shape = 'u8[16384]{0}', space=vmem, size = 0x4000, scoped, tag = 'input window, operand 1']
    #allocation7 [shape = 's32[2]{0}', space=sflag, size = 0x8, scoped, tag = 'scoped memory for tpu_custom_call.1']
    #allocation8 [shape = 'u8[16384]{0}', space=vmem, size = 0x4000, scoped, tag = 'output window, operand 0']
    #allocation9 [shape = 'u8[2048]{0}', space=vmem, size = 0x800, scoped, tag = 'output window, operand 1']
    #allocation10 [shape = 's32[2]{0}', space=sflag, size = 0x8, scoped, tag = 'scoped memory for tpu_custom_call.1']
    %11 = vsyncpa [#allocation4], 0
    %s12 = scalar_lea.sflag [#allocation4], 1
    %13 = vsyncpa %s12, 0
    %14 = vsyncpa [#allocation7], 0
    %s15 = scalar_lea.sflag [#allocation7], 1
    %16 = vsyncpa %s15, 0
    %17 = vsyncpa [#allocation5], 0
    %s18 = scalar_lea.sflag [#allocation5], 1
    %19 = vsyncpa %s18, 0
    %20 = vsyncpa [#allocation10], 0
    %s21 = scalar_lea.sflag [#allocation10], 1
    %22 = vsyncpa %s21, 0
    loop: start=0, step=1, limit=4
    $region2: #{tpu_custom_call.1} parent=1 // loop_pre_header
      _
    $region3: #{tpu_custom_call.1} parent=1 // loop_header
      %s24 = sphi 0, %s28
      %p25 = scmp.ge.s32.totalorder %s24, 4
      %s31 = sphi 0, %s43
      %s32 = sphi 0, %s39
      %s33 = sphi 0, %s31
      %s34 = sphi 0, %s32
      %s35 = sphi 0, %s33
      %s36 = sphi 0, %s34
      %s56 = sphi 0, %s58
      %s59 = sphi 0, %s56
      %s60 = sphi 0, %s59
      %s76 = sphi 0, %s60
      %s82 = sphi 0, %s84
      %s85 = sphi 0, %s82
      %s86 = sphi 0, %s85
      %s102 = sphi 0, %s86
      %s108 = sphi 0, %s110
      %s111 = sphi 0, %s108
      %s112 = sphi 0, %s111
      %s128 = sphi 0, %s112
      %s132 = sphi 0, %s132
      %s134 = sphi 0, %s132
      %s135 = sphi 0, %s134
      %s149 = sphi 0, %s135
      %s165 = sphi 0, %s167
      %s168 = sphi 0, %s165
      %s169 = sphi 0, %s168
      %s185 = sphi 0, %s169
      %s191 = sphi 0, %s193
      %s194 = sphi 0, %s191
      %s195 = sphi 0, %s194
      %s211 = sphi 0, %s195
    $region4: #{tpu_custom_call.1} parent=1 // loop_header_branch
      %27 = sbr.rel (%p25) target = $region8
    $region5: #{tpu_custom_call.1} parent=1 // loop_body
      %s29 = ssub.s32 %s24, 1
      %s30 = ssub.s32 %s24, 2
      %s37 = sadd.s32 1, %s32
      %p38 = scmp.ge.s32.totalorder %s37, 1
      %s39 = scalar_select %p38, 0, %s37
      %s40 = sadd.s32 1, %s31
      %s41 = scalar_select %p38, %s40, %s31
      %p42 = scmp.ge.s32.totalorder %s41, 2
      %s43 = scalar_select %p42, 0, %s41
      %s44 = smul.u32 %s32, 2
      %s45 = ssub.s32 0, %s44
      %s46 = smul.u32 %s31, %s45
      %s47 = sadd.s32 %s32, %s46
      %s48 = smul.u32 %s39, 2
      %s49 = ssub.s32 0, %s48
      %s50 = smul.u32 %s43, %s49
      %s51 = sadd.s32 %s39, %s50
      %s52 = ssub.s32 %s31, %s43
      %s53 = ssub.s32 %s47, %s51
      %s54 = sor.u32 %s52, %s53
      %p55 = scmp.eq.s32.totalorder %s54, 0
      %s57 = sadd.s32 %s56, 1
      %s58 = scalar_select %p55, %s56, %s57
      %p61 = pneg %p55
      %p62 = scmp.eq.s32.totalorder %s24, 1
      %p63 = por %p61, %p62
      %p64 = scmp.ne.s32.totalorder %s56, %s59
      %p65 = scmp.eq.s32.totalorder %s24, 0
      %p66 = por %p64, %p65
      %p67 = scmp.ne.s32.totalorder %s56, %s59
      %p68 = scmp.eq.s32.totalorder %s29, 1
      %p69 = por %p67, %p68
      %p70 = scmp.ne.s32.totalorder %s59, %s60
      %p71 = scmp.eq.s32.totalorder %s29, 0
      %p72 = por %p70, %p71
      %p73 = scmp.ne.s32.totalorder %s59, %s60
      %p74 = scmp.eq.s32.totalorder %s30, 1
      %p75 = por %p73, %p74
      %p77 = scmp.ne.s32.totalorder %s60, %s76
      %p78 = scmp.eq.s32.totalorder %s30, 0
      %p79 = por %p77, %p78
      %s80 = ssub.s32 %s31, %s43
      %p81 = scmp.eq.s32.totalorder %s80, 0
      %s83 = sadd.s32 %s82, 1
      %s84 = scalar_select %p81, %s82, %s83
      %p87 = pneg %p81
      %p88 = scmp.eq.s32.totalorder %s24, 1
      %p89 = por %p87, %p88
      %p90 = scmp.ne.s32.totalorder %s82, %s85
      %p91 = scmp.eq.s32.totalorder %s24, 0
      %p92 = por %p90, %p91
      %p93 = scmp.ne.s32.totalorder %s82, %s85
      %p94 = scmp.eq.s32.totalorder %s29, 1
      %p95 = por %p93, %p94
      %p96 = scmp.ne.s32.totalorder %s85, %s86
      %p97 = scmp.eq.s32.totalorder %s29, 0
      %p98 = por %p96, %p97
      %p99 = scmp.ne.s32.totalorder %s85, %s86
      %p100 = scmp.eq.s32.totalorder %s30, 1
      %p101 = por %p99, %p100
      %p103 = scmp.ne.s32.totalorder %s86, %s102
      %p104 = scmp.eq.s32.totalorder %s30, 0
      %p105 = por %p103, %p104
      %s106 = ssub.s32 %s31, %s43
      %p107 = scmp.eq.s32.totalorder %s106, 0
      %s109 = sadd.s32 %s108, 1
      %s110 = scalar_select %p107, %s108, %s109
      %p113 = pneg %p107
      %p114 = scmp.eq.s32.totalorder %s24, 1
      %p115 = por %p113, %p114
      %p116 = scmp.ne.s32.totalorder %s108, %s111
      %p117 = scmp.eq.s32.totalorder %s24, 0
      %p118 = por %p116, %p117
      %p119 = scmp.ne.s32.totalorder %s108, %s111
      %p120 = scmp.eq.s32.totalorder %s29, 1
      %p121 = por %p119, %p120
      %p122 = scmp.ne.s32.totalorder %s111, %s112
      %p123 = scmp.eq.s32.totalorder %s29, 0
      %p124 = por %p122, %p123
      %p125 = scmp.ne.s32.totalorder %s111, %s112
      %p126 = scmp.eq.s32.totalorder %s30, 1
      %p127 = por %p125, %p126
      %p129 = scmp.ne.s32.totalorder %s112, %s128
      %p130 = scmp.eq.s32.totalorder %s30, 0
      %p131 = por %p129, %p130
      %s133 = sadd.s32 %s132, 1
      %p136 = scmp.eq.s32.totalorder %s24, 1
      %p137 = scmp.ne.s32.totalorder %s132, %s134
      %p138 = scmp.eq.s32.totalorder %s24, 0
      %p139 = por %p137, %p138
      %p140 = scmp.ne.s32.totalorder %s132, %s134
      %p141 = scmp.eq.s32.totalorder %s29, 1
      %p142 = por %p140, %p141
      %p143 = scmp.ne.s32.totalorder %s134, %s135
      %p144 = scmp.eq.s32.totalorder %s29, 0
      %p145 = por %p143, %p144
      %p146 = scmp.ne.s32.totalorder %s134, %s135
      %p147 = scmp.eq.s32.totalorder %s30, 1
      %p148 = por %p146, %p147
      %p150 = scmp.ne.s32.totalorder %s135, %s149
      %p151 = scmp.eq.s32.totalorder %s30, 0
      %p152 = por %p150, %p151
      %s153 = smul.u32 %s32, 2
      %s154 = ssub.s32 0, %s153
      %s155 = smul.u32 %s31, %s154
      %s156 = sadd.s32 %s32, %s155
      %s157 = smul.u32 %s39, 2
      %s158 = ssub.s32 0, %s157
      %s159 = smul.u32 %s43, %s158
      %s160 = sadd.s32 %s39, %s159
      %s161 = ssub.s32 %s31, %s43
      %s162 = ssub.s32 %s156, %s160
      %s163 = sor.u32 %s161, %s162
      %p164 = scmp.eq.s32.totalorder %s163, 0
      %s166 = sadd.s32 %s165, 1
      %s167 = scalar_select %p164, %s165, %s166
      %p170 = pneg %p164
      %p171 = scmp.eq.s32.totalorder %s24, 1
      %p172 = por %p170, %p171
      %p173 = scmp.ne.s32.totalorder %s165, %s168
      %p174 = scmp.eq.s32.totalorder %s24, 0
      %p175 = por %p173, %p174
      %p176 = scmp.ne.s32.totalorder %s165, %s168
      %p177 = scmp.eq.s32.totalorder %s29, 1
      %p178 = por %p176, %p177
      %p179 = scmp.ne.s32.totalorder %s168, %s169
      %p180 = scmp.eq.s32.totalorder %s29, 0
      %p181 = por %p179, %p180
      %p182 = scmp.ne.s32.totalorder %s168, %s169
      %p183 = scmp.eq.s32.totalorder %s30, 1
      %p184 = por %p182, %p183
      %p186 = scmp.ne.s32.totalorder %s169, %s185
      %p187 = scmp.eq.s32.totalorder %s30, 0
      %p188 = por %p186, %p187
      %s189 = ssub.s32 %s31, %s43
      %p190 = scmp.eq.s32.totalorder %s189, 0
      %s192 = sadd.s32 %s191, 1
      %s193 = scalar_select %p190, %s191, %s192
      %p196 = pneg %p190
      %p197 = scmp.eq.s32.totalorder %s24, 1
      %p198 = por %p196, %p197
      %p199 = scmp.ne.s32.totalorder %s191, %s194
      %p200 = scmp.eq.s32.totalorder %s24, 0
      %p201 = por %p199, %p200
      %p202 = scmp.ne.s32.totalorder %s191, %s194
      %p203 = scmp.eq.s32.totalorder %s29, 1
      %p204 = por %p202, %p203
      %p205 = scmp.ne.s32.totalorder %s194, %s195
      %p206 = scmp.eq.s32.totalorder %s29, 0
      %p207 = por %p205, %p206
      %p208 = scmp.ne.s32.totalorder %s194, %s195
      %p209 = scmp.eq.s32.totalorder %s30, 1
      %p210 = por %p208, %p209
      %p212 = scmp.ne.s32.totalorder %s195, %s211
      %p213 = scmp.eq.s32.totalorder %s30, 0
      %p214 = por %p212, %p213
      %p215 = scmp.le.s32.totalorder 1, %s24
      %p216 = scmp.lt.s32.totalorder %s24, 3
      %p217 = pnand %p215, %p216
      %p218 = pneg %p217
      // Predicated region
      $region9: #{tpu_custom_call.1} parent=5 // pred_check
        _
      $region10: #{tpu_custom_call.1} parent=5 // pred_check_branch
        %220 = sbr.rel (%p217) target = $region12
      $region11: #{tpu_custom_call.1} parent=5 // pred_region
        %s221 = ssub.s32 %s24, 1
        // Predicated region
        $region13: #{tpu_custom_call.1} parent=11 // pred_check
          %p222 = pneg %p145
        $region14: #{tpu_custom_call.1} parent=11 // pred_check_branch
          %224 = sbr.rel (%p222) target = $region16
        $region15: #{tpu_custom_call.1} parent=11 // pred_region
          _
        $region16: #{tpu_custom_call.1} parent=11 // pred_fallthru
          _
      $region12: #{tpu_custom_call.1} parent=5 // pred_fallthru
        _
      %p225 = scmp.lt.s32.totalorder %s24, 2
      // Predicated region
      $region17: #{tpu_custom_call.1} parent=5 // pred_check
        %p226 = pneg %p225
      $region18: #{tpu_custom_call.1} parent=5 // pred_check_branch
        %228 = sbr.rel (%p226) target = $region20
      $region19: #{tpu_custom_call.1} parent=5 // pred_region
        // Predicated region
        $region21: #{tpu_custom_call.1} parent=19 // pred_check
          %p229 = pneg %p66
        $region22: #{tpu_custom_call.1} parent=19 // pred_check_branch
          %231 = sbr.rel (%p229) target = $region24
        $region23: #{tpu_custom_call.1} parent=19 // pred_region
          %s232 = sand.u32 %s56, 1
          %s233 = scalar_lea.sflag [#allocation4], %s232
          %s234 = sand.u32 %s56, 1
          %s235 = smul.addr %s234, 8
          %s236 = scalar_lea.vmem [#allocation3], %s235
          %s237 = smul.u32 %s32, 2
          %s238 = ssub.s32 0, %s237
          %s239 = smul.u32 %s31, %s238
          %s240 = sadd.s32 %s32, %s239
          %s241 = smul.u32 8, %s240
          %s243 = ssub.s32 128, 128
          %244 = vsyncadd %s233, %s243
          %s245 = smul.addr %s31, 8
          %s246 = sadd.s32 %s241, %s245
          %s247 = smul.addr %s246, 16
          %s248 = scalar_lea.hbm %s0, %s247
          %s249 = sshll.u32 %s236, 4
          %s250 = int_to_ptr.vmem [resolvable:$true] %s249
          %255 = dma.hbm_to_vmem [thread:$0]  %s248, 128, %s250, %s233, 16, 16, 1
        $region24: #{tpu_custom_call.1} parent=19 // pred_fallthru
          _
        // Predicated region
        $region25: #{tpu_custom_call.1} parent=19 // pred_check
          %p256 = pneg %p92
        $region26: #{tpu_custom_call.1} parent=19 // pred_check_branch
          %258 = sbr.rel (%p256) target = $region28
        $region27: #{tpu_custom_call.1} parent=19 // pred_region
          %s259 = sand.u32 %s82, 1
          %s260 = scalar_lea.sflag [#allocation7], %s259
          %s261 = sand.u32 %s82, 1
          %s262 = smul.addr %s261, 16
          %s263 = scalar_lea.vmem [#allocation6], %s262
          %s265 = ssub.s32 256, 256
          %266 = vsyncadd %s260, %s265
          %s267 = smul.addr %s31, 4
          %s268 = smul.addr %s267, 64
          %s269 = scalar_lea.hbm %s1, %s268
          %s270 = sshll.u32 %s263, 4
          %s271 = int_to_ptr.vmem [resolvable:$true] %s270
          %276 = dma.hbm_to_vmem [thread:$0]  %s269, 256, %s271, %s260, 64, 64, 4
        $region28: #{tpu_custom_call.1} parent=19 // pred_fallthru
          _
        // Predicated region
        $region29: #{tpu_custom_call.1} parent=19 // pred_check
          %p277 = pneg %p118
        $region30: #{tpu_custom_call.1} parent=19 // pred_check_branch
          %279 = sbr.rel (%p277) target = $region32
        $region31: #{tpu_custom_call.1} parent=19 // pred_region
          %p280 = scmp.lt.s32.totalorder %s31, 1
          %s281 = scalar_select %p280, %s31, 1
          %s282 = scalar_lea.vmem %s2, %s281
        $region32: #{tpu_custom_call.1} parent=19 // pred_fallthru
          _
      $region20: #{tpu_custom_call.1} parent=5 // pred_fallthru
        _
      %p283 = scmp.le.s32.totalorder 1, %s24
      %p284 = scmp.lt.s32.totalorder %s24, 3
      %p285 = pnand %p283, %p284
      %p286 = pneg %p285
      // Predicated region
      $region33: #{tpu_custom_call.1} parent=5 // pred_check
        _
      $region34: #{tpu_custom_call.1} parent=5 // pred_check_branch
        %288 = sbr.rel (%p285) target = $region36
      $region35: #{tpu_custom_call.1} parent=5 // pred_region
        %s289 = ssub.s32 %s24, 1
        %s290 = sand.u32 %s59, 1
        %s291 = scalar_lea.sflag [#allocation4], %s290
        %s292 = sand.u32 %s59, 1
        %s293 = smul.addr %s292, 8
        %s294 = scalar_lea.vmem [#allocation3], %s293
        // Predicated region
        $region37: #{tpu_custom_call.1} parent=35 // pred_check
          %p295 = pneg %p72
        $region38: #{tpu_custom_call.1} parent=35 // pred_check_branch
          %297 = sbr.rel (%p295) target = $region40
        $region39: #{tpu_custom_call.1} parent=35 // pred_region
          %298 = dma.done %s291, 128
        $region40: #{tpu_custom_call.1} parent=35 // pred_fallthru
          _
        %s299 = sand.u32 %s85, 1
        %s300 = scalar_lea.sflag [#allocation7], %s299
        %s301 = sand.u32 %s85, 1
        %s302 = smul.addr %s301, 16
        %s303 = scalar_lea.vmem [#allocation6], %s302
        // Predicated region
        $region41: #{tpu_custom_call.1} parent=35 // pred_check
          %p304 = pneg %p98
        $region42: #{tpu_custom_call.1} parent=35 // pred_check_branch
          %306 = sbr.rel (%p304) target = $region44
        $region43: #{tpu_custom_call.1} parent=35 // pred_region
          %307 = dma.done %s300, 256
        $region44: #{tpu_custom_call.1} parent=35 // pred_fallthru
          _
        %s308 = sand.u32 %s59, 1
        %s309 = scalar_lea.sflag [#allocation4], %s308
        %s310 = sand.u32 %s59, 1
        %s311 = smul.addr %s310, 8
        %s312 = scalar_lea.vmem [#allocation3], %s311
        %p313 = pneg %p72
        %p314 = pneg %p69
        %s315 = sand.u32 %s85, 1
        %s316 = scalar_lea.sflag [#allocation7], %s315
        %s317 = sand.u32 %s85, 1
        %s318 = smul.addr %s317, 16
        %s319 = scalar_lea.vmem [#allocation6], %s318
        %p320 = pneg %p98
        %p321 = pneg %p95
        %p322 = scmp.lt.s32.totalorder %s33, 1
        %s323 = scalar_select %p322, %s33, 1
        %s324 = scalar_lea.vmem %s2, %s323
        %p325 = pneg %p124
        %p326 = pneg %p121
        %p327 = pneg %p145
        %p328 = pneg %p142
        %p329 = pneg %p181
        %p330 = pneg %p178
        %s331 = sand.u32 %s168, 1
        %s332 = scalar_lea.sflag [#allocation5], %s331
        %s333 = sand.u32 %s168, 1
        %s334 = smul.addr %s333, 16
        %s335 = scalar_lea.vmem [#allocation8], %s334
        %p336 = pneg %p207
        %p337 = pneg %p204
        %s338 = sand.u32 %s194, 1
        %s339 = scalar_lea.sflag [#allocation10], %s338
        %s340 = sand.u32 %s194, 1
        %s341 = smul.addr %s340, 2
        %s342 = scalar_lea.vmem [#allocation9], %s341
        %s343 = smul.u32 %s34, 2
        %s344 = ssub.s32 0, %s343
        %s345 = smul.u32 %s33, %s344
        %s346 = sadd.s32 %s34, %s345
        %s347 = smul.u32 8, %s346
        %p348 = scmp.lt.s32.totalorder %s33, 1
        %s349 = scalar_select %p348, %s33, 1
        %s350 = scalar_lea.vmem %s2, %s349
        %s351 = smul.u32 %s34, 2
        %s352 = ssub.s32 0, %s351
        %s353 = smul.u32 %s33, %s352
        %s354 = sadd.s32 %s34, %s353
        %s355 = smul.u32 8, %s354
        %p357 = scmp.eq.s32.totalorder %s34, 0
        // Predicated region
        $region45: #{tpu_custom_call.1} parent=35 // pred_check
          %p358 = pneg %p357
        $region46: #{tpu_custom_call.1} parent=35 // pred_check_branch
          %360 = sbr.rel (%p358) target = $region48
        $region47: #{tpu_custom_call.1} parent=35 // pred_region
          %vm361 = vcmask 254976
          %362 = vst.msk [vmem:[#allocation2] sm:$0x3] %vm361, 0.0
        $region48: #{tpu_custom_call.1} parent=35 // pred_fallthru
          _
        %v363 = vld [vmem:[%s303] sm:$0xf]
        %v364 = vld [vmem:[%s303 + $0x4] sm:$0xf]
        %v365 = vld [vmem:[%s303 + $0x8] sm:$0xf]
        %v366 = vld [vmem:[%s303 + $0xc] sm:$0xf]
        %v367 = vld [vmem:[%s350] sm:$0x1]
        %v368 = vld [vmem:[%s3] sm:$0x3]
        %s369 = smul.u32 %s34, 8
        %v370 = vld [vmem:[#allocation2] sm:$0x3]
        %s371 = smul.u32 %s33, 7
        %s372 = smul.u32 %s34, 16
        %s373 = ssub.s32 7, %s372
        %s374 = smul.u32 %s33, %s373
        %s375 = sadd.s32 %s369, %s374
        %s376 = scalar_lea.vmem %s294, %s371 [#allocation3]
        %v377 = vld [vmem:[%s376] sm:$0x1]
        %v378 = vunpack.c.l.bf16 %v377
        %v379 = vpack.c.bf16 %v370, %v370
        %v381 = vlaneseq
        %v382 = vshrl.u32 %v381, 7
        %v383 = vsub.s32 0, %v382
        %v384 = vrot.slane %v367, %v383
        %v390 = vunpack.c.l.b16 %v363
        %v391 = vunpack.c.l.b16 %v364
        %v392 = vunpack.c.l.b16 %v365
        %v393 = vunpack.c.l.b16 %v366
        %v394 = vpack.c.b16 %v391, %v390
        %v395 = vpack.c.b16 %v393, %v392
        %vm398 = vcmask 261120
        %v400 = vsel %vm398, %v379, 0
        %402 = vmatprep.subr.bf16.mxu0 0
        %403 = vmatpush1.bf16.msra.mxu0 %v394
        %404 = vmatprep.subr.bf16.mxu0 0
        %405 = vmatpush1.bf16.msra.mxu0 %v395
        %406 = vmatprep.subr.bf16.mxu0 0
        %407 = vmatpush1.bf16.msra.mxu0 0
        %408 = vmatprep.subr.bf16.mxu0 0
        %409 = vmatpush1.bf16.msra.mxu0 0
        %410 = vmatprep.subr.bf16.mxu0 0
        %411 = vmatpush1.bf16.msra.mxu0 0
        %412 = vmatprep.subr.bf16.mxu0 0
        %413 = vmatpush1.bf16.msra.mxu0 0
        %414 = vmatprep.subr.bf16.mxu0 0
        %415 = vmatpush1.bf16.msra.mxu0 0
        %416 = vmatprep.subr.bf16.mxu0 0
        %417 = vmatpush1.bf16.msra.mxu0 0
        %418 = vmatprep.subr.bf16.mxu0 0
        %419 = vmatpush1.bf16.msra.mxu0 0
        %420 = vmatprep.subr.bf16.mxu0 0
        %421 = vmatpush1.bf16.msra.mxu0 0
        %422 = vmatprep.subr.bf16.mxu0 0
        %423 = vmatpush1.bf16.msra.mxu0 0
        %424 = vmatprep.subr.bf16.mxu0 0
        %425 = vmatpush1.bf16.msra.mxu0 0
        %426 = vmatprep.subr.bf16.mxu0 0
        %427 = vmatpush1.bf16.msra.mxu0 0
        %428 = vmatprep.subr.bf16.mxu0 0
        %429 = vmatpush1.bf16.msra.mxu0 0
        %430 = vmatprep.subr.bf16.mxu0 0
        %431 = vmatpush1.bf16.msra.mxu0 0
        %432 = vmatprep.subr.bf16.mxu0 0
        %433 = vmatpush1.bf16.msra.mxu0 0
        %434 = vmatprep.mubr.bf16.mxu0 0
        %435 = vmatmul.mubr.bf16.gmra.mrb[0].mxu0 %v400
        %v436 = vpop.f32.mrb[0].mxu0
        %v437 = vadd.f32 %v384, %v436
        %v438 = vpop.f32.mrb[0].mxu0
        %v439 = vpop.f32.mrb[0].mxu0
        %v440 = vpop.f32.mrb[0].mxu0
        %441 = vdwg.mxu0
        %v442 = vadd.f32 %v378, %v437
        %v443 = vxor.u32 %v442, 2147483648
        %v444 = vmul.f32 %v443, 1.442695
        %v445 = vpow.pop %v444
        %v446 = vadd.f32 %v445, 1.0
        %v447 = vrcp.pop %v446
        %v448 = vmul.f32 1.0, %v447
        %v451 = vunpack.c.l.s4 1983009808
        %v452 = vunpack.c.0.s8 %v451
        %v453 = vlaneseq
        %v454 = vshrl.u32 %v453, 7
        %v455 = vsub.s32 %v452, %v454
        %v456 = vrot.slane %v437, %v455
        %457 = vrot.lane.b32.xlu0 %v456, 64
        %v458 = vpop.permute.xlu0 %457
        %v460 = vmul.f32 %v448, %v458
        %462 = vrot.lane.b32.xlu0 %v460, 64
        %v463 = vpop.permute.xlu0 %462
        %v465 = vadd.f32 %v378, %v463
        %v466 = vtanh.pop %v465
        %v467 = vsub.f32 1.0, %v448
        %469 = vrot.lane.b32.xlu0 %v466, 96
        %v470 = vpop.permute.xlu0 %469
        %v472 = vmul.f32 %v467, %v470
        %v475 = vunpack.c.l.s4 1983009808
        %v476 = vunpack.c.0.s8 %v475
        %v477 = vlaneseq
        %v478 = vshrl.u32 %v477, 7
        %v479 = vsub.s32 %v476, %v478
        %v480 = vrot.slane %v370, %v479
        %481 = vrot.lane.b32.xlu0 %v480, 32
        %v482 = vpop.permute.xlu0 %481
        %v484 = vmul.f32 %v448, %v482
        %v485 = vadd.f32 %v472, %v484
        %v486 = vstv %s375
        %vm487 = vcmp.lt.s32.totalorder %v486, %v368
        %v488 = vsel %vm487, 1, 0
        %489 = vset.pattern.permute.xlu0 0
        %490 = vperm.xlu0 %489, %v488
        %v491 = vpop.permute.xlu0 %490
        %vm492 = vcmp.eq.s32.totalorder %v491, 1
        %v495 = vunpack.c.l.s4 1983009808
        %v496 = vunpack.c.0.s8 %v495
        %v497 = vlaneseq
        %v498 = vshrl.u32 %v497, 7
        %v499 = vsub.s32 %v496, %v498
        %v500 = vrot.slane %v485, %v499
        %501 = vrot.lane.b32.xlu0 %v500, 96
        %v502 = vpop.permute.xlu0 %501
        %v504 = vsel %vm492, %v502, 0.0
        %s505 = smul.u32 %s371, 2
        %s506 = scalar_lea.vmem %s335, %s505 [#allocation8]
        %vm507 = vcmask 254976
        %508 = vst.msk [vmem:[%s506] sm:$0x3] %vm507, %v504
        %v509 = vsel %vm492, %v502, %v370
        %s510 = sadd.s32 %s369, 1
        %s511 = smul.u32 %s33, 5
        %s512 = sadd.s32 %s511, 1
        %s513 = smul.u32 %s510, 2
        %s514 = ssub.s32 7, %s513
        %s515 = smul.u32 %s33, %s514
        %s516 = sadd.s32 %s510, %s515
        %s517 = scalar_lea.vmem %s294, %s512 [#allocation3]
        %v518 = vld [vmem:[%s517] sm:$0x1]
        %v519 = vunpack.c.l.bf16 %v518
        %v520 = vpack.c.bf16 %v509, %v509
        %v522 = vsel %vm398, %v520, 0
        %524 = vmatprep.subr.bf16.mxu0 0
        %525 = vmatpush1.bf16.msra.mxu0 %v394
        %526 = vmatprep.subr.bf16.mxu0 0
        %527 = vmatpush1.bf16.msra.mxu0 %v395
        %528 = vmatprep.subr.bf16.mxu0 0
        %529 = vmatpush1.bf16.msra.mxu0 0
        %530 = vmatprep.subr.bf16.mxu0 0
        %531 = vmatpush1.bf16.msra.mxu0 0
        %532 = vmatprep.subr.bf16.mxu0 0
        %533 = vmatpush1.bf16.msra.mxu0 0
        %534 = vmatprep.subr.bf16.mxu0 0
        %535 = vmatpush1.bf16.msra.mxu0 0
        %536 = vmatprep.subr.bf16.mxu0 0
        %537 = vmatpush1.bf16.msra.mxu0 0
        %538 = vmatprep.subr.bf16.mxu0 0
        %539 = vmatpush1.bf16.msra.mxu0 0
        %540 = vmatprep.subr.bf16.mxu0 0
        %541 = vmatpush1.bf16.msra.mxu0 0
        %542 = vmatprep.subr.bf16.mxu0 0
        %543 = vmatpush1.bf16.msra.mxu0 0
        %544 = vmatprep.subr.bf16.mxu0 0
        %545 = vmatpush1.bf16.msra.mxu0 0
        %546 = vmatprep.subr.bf16.mxu0 0
        %547 = vmatpush1.bf16.msra.mxu0 0
        %548 = vmatprep.subr.bf16.mxu0 0
        %549 = vmatpush1.bf16.msra.mxu0 0
        %550 = vmatprep.subr.bf16.mxu0 0
        %551 = vmatpush1.bf16.msra.mxu0 0
        %552 = vmatprep.subr.bf16.mxu0 0
        %553 = vmatpush1.bf16.msra.mxu0 0
        %554 = vmatprep.subr.bf16.mxu0 0
        %555 = vmatpush1.bf16.msra.mxu0 0
        %556 = vmatprep.mubr.bf16.mxu0 0
        %557 = vmatmul.mubr.bf16.gmra.mrb[0].mxu0 %v522
        %v558 = vpop.f32.mrb[0].mxu0
        %v559 = vadd.f32 %v384, %v558
        %v560 = vpop.f32.mrb[0].mxu0
        %v561 = vpop.f32.mrb[0].mxu0
        %v562 = vpop.f32.mrb[0].mxu0
        %563 = vdwg.mxu0
        %v564 = vadd.f32 %v519, %v559
        %v565 = vxor.u32 %v564, 2147483648
        %v566 = vmul.f32 %v565, 1.442695
        %v567 = vpow.pop %v566
        %v568 = vadd.f32 %v567, 1.0
        %v569 = vrcp.pop %v568
        %v570 = vmul.f32 1.0, %v569
        %v573 = vunpack.c.l.s4 1983009808
        %v574 = vunpack.c.0.s8 %v573
        %v575 = vlaneseq
        %v576 = vshrl.u32 %v575, 7
        %v577 = vsub.s32 %v574, %v576
        %v578 = vrot.slane %v559, %v577
        %579 = vrot.lane.b32.xlu0 %v578, 64
        %v580 = vpop.permute.xlu0 %579
        %v582 = vmul.f32 %v570, %v580
        %584 = vrot.lane.b32.xlu0 %v582, 64
        %v585 = vpop.permute.xlu0 %584
        %v587 = vadd.f32 %v519, %v585
        %v588 = vtanh.pop %v587
        %v589 = vsub.f32 1.0, %v570
        %591 = vrot.lane.b32.xlu0 %v588, 96
        %v592 = vpop.permute.xlu0 %591
        %v594 = vmul.f32 %v589, %v592
        %v597 = vunpack.c.l.s4 1983009808
        %v598 = vunpack.c.0.s8 %v597
        %v599 = vlaneseq
        %v600 = vshrl.u32 %v599, 7
        %v601 = vsub.s32 %v598, %v600
        %v602 = vrot.slane %v509, %v601
        %603 = vrot.lane.b32.xlu0 %v602, 32
        %v604 = vpop.permute.xlu0 %603
        %v606 = vmul.f32 %v570, %v604
        %v607 = vadd.f32 %v594, %v606
        %v608 = vstv %s516
        %vm609 = vcmp.lt.s32.totalorder %v608, %v368
        %v610 = vsel %vm609, 1, 0
        %611 = vset.pattern.permute.xlu0 0
        %612 = vperm.xlu0 %611, %v610
        %v613 = vpop.permute.xlu0 %612
        %vm614 = vcmp.eq.s32.totalorder %v613, 1
        %v617 = vunpack.c.l.s4 1983009808
        %v618 = vunpack.c.0.s8 %v617
        %v619 = vlaneseq
        %v620 = vshrl.u32 %v619, 7
        %v621 = vsub.s32 %v618, %v620
        %v622 = vrot.slane %v607, %v621
        %623 = vrot.lane.b32.xlu0 %v622, 96
        %v624 = vpop.permute.xlu0 %623
        %v626 = vsel %vm614, %v624, 0.0
        %s627 = smul.u32 %s512, 2
        %s628 = scalar_lea.vmem %s335, %s627 [#allocation8]
        %629 = vst.msk [vmem:[%s628] sm:$0x3] %vm507, %v626
        %v630 = vsel %vm614, %v624, %v509
        %s631 = sadd.s32 %s369, 2
        %s632 = smul.u32 %s33, 3
        %s633 = sadd.s32 %s632, 2
        %s634 = smul.u32 %s631, 2
        %s635 = ssub.s32 7, %s634
        %s636 = smul.u32 %s33, %s635
        %s637 = sadd.s32 %s631, %s636
        %s638 = scalar_lea.vmem %s294, %s633 [#allocation3]
        %v639 = vld [vmem:[%s638] sm:$0x1]
        %v640 = vunpack.c.l.bf16 %v639
        %v641 = vpack.c.bf16 %v630, %v630
        %v643 = vsel %vm398, %v641, 0
        %645 = vmatprep.subr.bf16.mxu0 0
        %646 = vmatpush1.bf16.msra.mxu0 %v394
        %647 = vmatprep.subr.bf16.mxu0 0
        %648 = vmatpush1.bf16.msra.mxu0 %v395
        %649 = vmatprep.subr.bf16.mxu0 0
        %650 = vmatpush1.bf16.msra.mxu0 0
        %651 = vmatprep.subr.bf16.mxu0 0
        %652 = vmatpush1.bf16.msra.mxu0 0
        %653 = vmatprep.subr.bf16.mxu0 0
        %654 = vmatpush1.bf16.msra.mxu0 0
        %655 = vmatprep.subr.bf16.mxu0 0
        %656 = vmatpush1.bf16.msra.mxu0 0
        %657 = vmatprep.subr.bf16.mxu0 0
        %658 = vmatpush1.bf16.msra.mxu0 0
        %659 = vmatprep.subr.bf16.mxu0 0
        %660 = vmatpush1.bf16.msra.mxu0 0
        %661 = vmatprep.subr.bf16.mxu0 0
        %662 = vmatpush1.bf16.msra.mxu0 0
        %663 = vmatprep.subr.bf16.mxu0 0
        %664 = vmatpush1.bf16.msra.mxu0 0
        %665 = vmatprep.subr.bf16.mxu0 0
        %666 = vmatpush1.bf16.msra.mxu0 0
        %667 = vmatprep.subr.bf16.mxu0 0
        %668 = vmatpush1.bf16.msra.mxu0 0
        %669 = vmatprep.subr.bf16.mxu0 0
        %670 = vmatpush1.bf16.msra.mxu0 0
        %671 = vmatprep.subr.bf16.mxu0 0
        %672 = vmatpush1.bf16.msra.mxu0 0
        %673 = vmatprep.subr.bf16.mxu0 0
        %674 = vmatpush1.bf16.msra.mxu0 0
        %675 = vmatprep.subr.bf16.mxu0 0
        %676 = vmatpush1.bf16.msra.mxu0 0
        %677 = vmatprep.mubr.bf16.mxu0 0
        %678 = vmatmul.mubr.bf16.gmra.mrb[0].mxu0 %v643
        %v679 = vpop.f32.mrb[0].mxu0
        %v680 = vadd.f32 %v384, %v679
        %v681 = vpop.f32.mrb[0].mxu0
        %v682 = vpop.f32.mrb[0].mxu0
        %v683 = vpop.f32.mrb[0].mxu0
        %684 = vdwg.mxu0
        %v685 = vadd.f32 %v640, %v680
        %v686 = vxor.u32 %v685, 2147483648
        %v687 = vmul.f32 %v686, 1.442695
        %v688 = vpow.pop %v687
        %v689 = vadd.f32 %v688, 1.0
        %v690 = vrcp.pop %v689
        %v691 = vmul.f32 1.0, %v690
        %v694 = vunpack.c.l.s4 1983009808
        %v695 = vunpack.c.0.s8 %v694
        %v696 = vlaneseq
        %v697 = vshrl.u32 %v696, 7
        %v698 = vsub.s32 %v695, %v697
        %v699 = vrot.slane %v680, %v698
        %700 = vrot.lane.b32.xlu0 %v699, 64
        %v701 = vpop.permute.xlu0 %700
        %v703 = vmul.f32 %v691, %v701
        %705 = vrot.lane.b32.xlu0 %v703, 64
        %v706 = vpop.permute.xlu0 %705
        %v708 = vadd.f32 %v640, %v706
        %v709 = vtanh.pop %v708
        %v710 = vsub.f32 1.0, %v691
        %712 = vrot.lane.b32.xlu0 %v709, 96
        %v713 = vpop.permute.xlu0 %712
        %v715 = vmul.f32 %v710, %v713
        %v718 = vunpack.c.l.s4 1983009808
        %v719 = vunpack.c.0.s8 %v718
        %v720 = vlaneseq
        %v721 = vshrl.u32 %v720, 7
        %v722 = vsub.s32 %v719, %v721
        %v723 = vrot.slane %v630, %v722
        %724 = vrot.lane.b32.xlu0 %v723, 32
        %v725 = vpop.permute.xlu0 %724
        %v727 = vmul.f32 %v691, %v725
        %v728 = vadd.f32 %v715, %v727
        %v729 = vstv %s637
        %vm730 = vcmp.lt.s32.totalorder %v729, %v368
        %v731 = vsel %vm730, 1, 0
        %732 = vset.pattern.permute.xlu0 0
        %733 = vperm.xlu0 %732, %v731
        %v734 = vpop.permute.xlu0 %733
        %vm735 = vcmp.eq.s32.totalorder %v734, 1
        %v738 = vunpack.c.l.s4 1983009808
        %v739 = vunpack.c.0.s8 %v738
        %v740 = vlaneseq
        %v741 = vshrl.u32 %v740, 7
        %v742 = vsub.s32 %v739, %v741
        %v743 = vrot.slane %v728, %v742
        %744 = vrot.lane.b32.xlu0 %v743, 96
        %v745 = vpop.permute.xlu0 %744
        %v747 = vsel %vm735, %v745, 0.0
        %s748 = smul.u32 %s633, 2
        %s749 = scalar_lea.vmem %s335, %s748 [#allocation8]
        %750 = vst.msk [vmem:[%s749] sm:$0x3] %vm507, %v747
        %v751 = vsel %vm735, %v745, %v630
        %s752 = sadd.s32 %s369, 3
        %s753 = sadd.s32 %s33, 3
        %s754 = smul.u32 %s752, 2
        %s755 = ssub.s32 7, %s754
        %s756 = smul.u32 %s33, %s755
        %s757 = sadd.s32 %s752, %s756
        %s758 = scalar_lea.vmem %s294, %s753 [#allocation3]
        %v759 = vld [vmem:[%s758] sm:$0x1]
        %v760 = vunpack.c.l.bf16 %v759
        %v761 = vpack.c.bf16 %v751, %v751
        %v763 = vsel %vm398, %v761, 0
        %765 = vmatprep.subr.bf16.mxu0 0
        %766 = vmatpush1.bf16.msra.mxu0 %v394
        %767 = vmatprep.subr.bf16.mxu0 0
        %768 = vmatpush1.bf16.msra.mxu0 %v395
        %769 = vmatprep.subr.bf16.mxu0 0
        %770 = vmatpush1.bf16.msra.mxu0 0
        %771 = vmatprep.subr.bf16.mxu0 0
        %772 = vmatpush1.bf16.msra.mxu0 0
        %773 = vmatprep.subr.bf16.mxu0 0
        %774 = vmatpush1.bf16.msra.mxu0 0
        %775 = vmatprep.subr.bf16.mxu0 0
        %776 = vmatpush1.bf16.msra.mxu0 0
        %777 = vmatprep.subr.bf16.mxu0 0
        %778 = vmatpush1.bf16.msra.mxu0 0
        %779 = vmatprep.subr.bf16.mxu0 0
        %780 = vmatpush1.bf16.msra.mxu0 0
        %781 = vmatprep.subr.bf16.mxu0 0
        %782 = vmatpush1.bf16.msra.mxu0 0
        %783 = vmatprep.subr.bf16.mxu0 0
        %784 = vmatpush1.bf16.msra.mxu0 0
        %785 = vmatprep.subr.bf16.mxu0 0
        %786 = vmatpush1.bf16.msra.mxu0 0
        %787 = vmatprep.subr.bf16.mxu0 0
        %788 = vmatpush1.bf16.msra.mxu0 0
        %789 = vmatprep.subr.bf16.mxu0 0
        %790 = vmatpush1.bf16.msra.mxu0 0
        %791 = vmatprep.subr.bf16.mxu0 0
        %792 = vmatpush1.bf16.msra.mxu0 0
        %793 = vmatprep.subr.bf16.mxu0 0
        %794 = vmatpush1.bf16.msra.mxu0 0
        %795 = vmatprep.subr.bf16.mxu0 0
        %796 = vmatpush1.bf16.msra.mxu0 0
        %797 = vmatprep.mubr.bf16.mxu0 0
        %798 = vmatmul.mubr.bf16.gmra.mrb[0].mxu0 %v763
        %v799 = vpop.f32.mrb[0].mxu0
        %v800 = vadd.f32 %v384, %v799
        %v801 = vpop.f32.mrb[0].mxu0
        %v802 = vpop.f32.mrb[0].mxu0
        %v803 = vpop.f32.mrb[0].mxu0
        %804 = vdwg.mxu0
        %v805 = vadd.f32 %v760, %v800
        %v806 = vxor.u32 %v805, 2147483648
        %v807 = vmul.f32 %v806, 1.442695
        %v808 = vpow.pop %v807
        %v809 = vadd.f32 %v808, 1.0
        %v810 = vrcp.pop %v809
        %v811 = vmul.f32 1.0, %v810
        %v814 = vunpack.c.l.s4 1983009808
        %v815 = vunpack.c.0.s8 %v814
        %v816 = vlaneseq
        %v817 = vshrl.u32 %v816, 7
        %v818 = vsub.s32 %v815, %v817
        %v819 = vrot.slane %v800, %v818
        %820 = vrot.lane.b32.xlu0 %v819, 64
        %v821 = vpop.permute.xlu0 %820
        %v823 = vmul.f32 %v811, %v821
        %825 = vrot.lane.b32.xlu0 %v823, 64
        %v826 = vpop.permute.xlu0 %825
        %v828 = vadd.f32 %v760, %v826
        %v829 = vtanh.pop %v828
        %v830 = vsub.f32 1.0, %v811
        %832 = vrot.lane.b32.xlu0 %v829, 96
        %v833 = vpop.permute.xlu0 %832
        %v835 = vmul.f32 %v830, %v833
        %v838 = vunpack.c.l.s4 1983009808
        %v839 = vunpack.c.0.s8 %v838
        %v840 = vlaneseq
        %v841 = vshrl.u32 %v840, 7
        %v842 = vsub.s32 %v839, %v841
        %v843 = vrot.slane %v751, %v842
        %844 = vrot.lane.b32.xlu0 %v843, 32
        %v845 = vpop.permute.xlu0 %844
        %v847 = vmul.f32 %v811, %v845
        %v848 = vadd.f32 %v835, %v847
        %v849 = vstv %s757
        %vm850 = vcmp.lt.s32.totalorder %v849, %v368
        %v851 = vsel %vm850, 1, 0
        %852 = vset.pattern.permute.xlu0 0
        %853 = vperm.xlu0 %852, %v851
        %v854 = vpop.permute.xlu0 %853
        %vm855 = vcmp.eq.s32.totalorder %v854, 1
        %v858 = vunpack.c.l.s4 1983009808
        %v859 = vunpack.c.0.s8 %v858
        %v860 = vlaneseq
        %v861 = vshrl.u32 %v860, 7
        %v862 = vsub.s32 %v859, %v861
        %v863 = vrot.slane %v848, %v862
        %864 = vrot.lane.b32.xlu0 %v863, 96
        %v865 = vpop.permute.xlu0 %864
        %v867 = vsel %vm855, %v865, 0.0
        %s868 = smul.u32 %s753, 2
        %s869 = scalar_lea.vmem %s335, %s868 [#allocation8]
        %870 = vst.msk [vmem:[%s869] sm:$0x3] %vm507, %v867
        %v871 = vsel %vm855, %v865, %v751
        %s872 = sadd.s32 %s369, 4
        %s873 = ssub.s32 4, %s33
        %s874 = smul.u32 %s872, 2
        %s875 = ssub.s32 7, %s874
        %s876 = smul.u32 %s33, %s875
        %s877 = sadd.s32 %s872, %s876
        %s878 = scalar_lea.vmem %s294, %s873 [#allocation3]
        %v879 = vld [vmem:[%s878] sm:$0x1]
        %v880 = vunpack.c.l.bf16 %v879
        %v881 = vpack.c.bf16 %v871, %v871
        %v883 = vsel %vm398, %v881, 0
        %885 = vmatprep.subr.bf16.mxu0 0
        %886 = vmatpush1.bf16.msra.mxu0 %v394
        %887 = vmatprep.subr.bf16.mxu0 0
        %888 = vmatpush1.bf16.msra.mxu0 %v395
        %889 = vmatprep.subr.bf16.mxu0 0
        %890 = vmatpush1.bf16.msra.mxu0 0
        %891 = vmatprep.subr.bf16.mxu0 0
        %892 = vmatpush1.bf16.msra.mxu0 0
        %893 = vmatprep.subr.bf16.mxu0 0
        %894 = vmatpush1.bf16.msra.mxu0 0
        %895 = vmatprep.subr.bf16.mxu0 0
        %896 = vmatpush1.bf16.msra.mxu0 0
        %897 = vmatprep.subr.bf16.mxu0 0
        %898 = vmatpush1.bf16.msra.mxu0 0
        %899 = vmatprep.subr.bf16.mxu0 0
        %900 = vmatpush1.bf16.msra.mxu0 0
        %901 = vmatprep.subr.bf16.mxu0 0
        %902 = vmatpush1.bf16.msra.mxu0 0
        %903 = vmatprep.subr.bf16.mxu0 0
        %904 = vmatpush1.bf16.msra.mxu0 0
        %905 = vmatprep.subr.bf16.mxu0 0
        %906 = vmatpush1.bf16.msra.mxu0 0
        %907 = vmatprep.subr.bf16.mxu0 0
        %908 = vmatpush1.bf16.msra.mxu0 0
        %909 = vmatprep.subr.bf16.mxu0 0
        %910 = vmatpush1.bf16.msra.mxu0 0
        %911 = vmatprep.subr.bf16.mxu0 0
        %912 = vmatpush1.bf16.msra.mxu0 0
        %913 = vmatprep.subr.bf16.mxu0 0
        %914 = vmatpush1.bf16.msra.mxu0 0
        %915 = vmatprep.subr.bf16.mxu0 0
        %916 = vmatpush1.bf16.msra.mxu0 0
        %917 = vmatprep.mubr.bf16.mxu0 0
        %918 = vmatmul.mubr.bf16.gmra.mrb[0].mxu0 %v883
        %v919 = vpop.f32.mrb[0].mxu0
        %v920 = vadd.f32 %v384, %v919
        %v921 = vpop.f32.mrb[0].mxu0
        %v922 = vpop.f32.mrb[0].mxu0
        %v923 = vpop.f32.mrb[0].mxu0
        %924 = vdwg.mxu0
        %v925 = vadd.f32 %v880, %v920
        %v926 = vxor.u32 %v925, 2147483648
        %v927 = vmul.f32 %v926, 1.442695
        %v928 = vpow.pop %v927
        %v929 = vadd.f32 %v928, 1.0
        %v930 = vrcp.pop %v929
        %v931 = vmul.f32 1.0, %v930
        %v934 = vunpack.c.l.s4 1983009808
        %v935 = vunpack.c.0.s8 %v934
        %v936 = vlaneseq
        %v937 = vshrl.u32 %v936, 7
        %v938 = vsub.s32 %v935, %v937
        %v939 = vrot.slane %v920, %v938
        %940 = vrot.lane.b32.xlu0 %v939, 64
        %v941 = vpop.permute.xlu0 %940
        %v943 = vmul.f32 %v931, %v941
        %945 = vrot.lane.b32.xlu0 %v943, 64
        %v946 = vpop.permute.xlu0 %945
        %v948 = vadd.f32 %v880, %v946
        %v949 = vtanh.pop %v948
        %v950 = vsub.f32 1.0, %v931
        %952 = vrot.lane.b32.xlu0 %v949, 96
        %v953 = vpop.permute.xlu0 %952
        %v955 = vmul.f32 %v950, %v953
        %v958 = vunpack.c.l.s4 1983009808
        %v959 = vunpack.c.0.s8 %v958
        %v960 = vlaneseq
        %v961 = vshrl.u32 %v960, 7
        %v962 = vsub.s32 %v959, %v961
        %v963 = vrot.slane %v871, %v962
        %964 = vrot.lane.b32.xlu0 %v963, 32
        %v965 = vpop.permute.xlu0 %964
        %v967 = vmul.f32 %v931, %v965
        %v968 = vadd.f32 %v955, %v967
        %v969 = vstv %s877
        %vm970 = vcmp.lt.s32.totalorder %v969, %v368
        %v971 = vsel %vm970, 1, 0
        %972 = vset.pattern.permute.xlu0 0
        %973 = vperm.xlu0 %972, %v971
        %v974 = vpop.permute.xlu0 %973
        %vm975 = vcmp.eq.s32.totalorder %v974, 1
        %v978 = vunpack.c.l.s4 1983009808
        %v979 = vunpack.c.0.s8 %v978
        %v980 = vlaneseq
        %v981 = vshrl.u32 %v980, 7
        %v982 = vsub.s32 %v979, %v981
        %v983 = vrot.slane %v968, %v982
        %984 = vrot.lane.b32.xlu0 %v983, 96
        %v985 = vpop.permute.xlu0 %984
        %v987 = vsel %vm975, %v985, 0.0
        %s988 = smul.u32 %s873, 2
        %s989 = scalar_lea.vmem %s335, %s988 [#allocation8]
        %990 = vst.msk [vmem:[%s989] sm:$0x3] %vm507, %v987
        %v991 = vsel %vm975, %v985, %v871
        %s992 = sadd.s32 %s369, 5
        %s993 = smul.u32 %s33, 4294967293
        %s994 = sadd.s32 %s993, 5
        %s995 = smul.u32 %s992, 2
        %s996 = ssub.s32 7, %s995
        %s997 = smul.u32 %s33, %s996
        %s998 = sadd.s32 %s992, %s997
        %s999 = scalar_lea.vmem %s294, %s994 [#allocation3]
        %v1000 = vld [vmem:[%s999] sm:$0x1]
        %v1001 = vunpack.c.l.bf16 %v1000
        %v1002 = vpack.c.bf16 %v991, %v991
        %v1004 = vsel %vm398, %v1002, 0
        %1006 = vmatprep.subr.bf16.mxu0 0
        %1007 = vmatpush1.bf16.msra.mxu0 %v394
        %1008 = vmatprep.subr.bf16.mxu0 0
        %1009 = vmatpush1.bf16.msra.mxu0 %v395
        %1010 = vmatprep.subr.bf16.mxu0 0
        %1011 = vmatpush1.bf16.msra.mxu0 0
        %1012 = vmatprep.subr.bf16.mxu0 0
        %1013 = vmatpush1.bf16.msra.mxu0 0
        %1014 = vmatprep.subr.bf16.mxu0 0
        %1015 = vmatpush1.bf16.msra.mxu0 0
        %1016 = vmatprep.subr.bf16.mxu0 0
        %1017 = vmatpush1.bf16.msra.mxu0 0
        %1018 = vmatprep.subr.bf16.mxu0 0
        %1019 = vmatpush1.bf16.msra.mxu0 0
        %1020 = vmatprep.subr.bf16.mxu0 0
        %1021 = vmatpush1.bf16.msra.mxu0 0
        %1022 = vmatprep.subr.bf16.mxu0 0
        %1023 = vmatpush1.bf16.msra.mxu0 0
        %1024 = vmatprep.subr.bf16.mxu0 0
        %1025 = vmatpush1.bf16.msra.mxu0 0
        %1026 = vmatprep.subr.bf16.mxu0 0
        %1027 = vmatpush1.bf16.msra.mxu0 0
        %1028 = vmatprep.subr.bf16.mxu0 0
        %1029 = vmatpush1.bf16.msra.mxu0 0
        %1030 = vmatprep.subr.bf16.mxu0 0
        %1031 = vmatpush1.bf16.msra.mxu0 0
        %1032 = vmatprep.subr.bf16.mxu0 0
        %1033 = vmatpush1.bf16.msra.mxu0 0
        %1034 = vmatprep.subr.bf16.mxu0 0
        %1035 = vmatpush1.bf16.msra.mxu0 0
        %1036 = vmatprep.subr.bf16.mxu0 0
        %1037 = vmatpush1.bf16.msra.mxu0 0
        %1038 = vmatprep.mubr.bf16.mxu0 0
        %1039 = vmatmul.mubr.bf16.gmra.mrb[0].mxu0 %v1004
        %v1040 = vpop.f32.mrb[0].mxu0
        %v1041 = vadd.f32 %v384, %v1040
        %v1042 = vpop.f32.mrb[0].mxu0
        %v1043 = vpop.f32.mrb[0].mxu0
        %v1044 = vpop.f32.mrb[0].mxu0
        %1045 = vdwg.mxu0
        %v1046 = vadd.f32 %v1001, %v1041
        %v1047 = vxor.u32 %v1046, 2147483648
        %v1048 = vmul.f32 %v1047, 1.442695
        %v1049 = vpow.pop %v1048
        %v1050 = vadd.f32 %v1049, 1.0
        %v1051 = vrcp.pop %v1050
        %v1052 = vmul.f32 1.0, %v1051
        %v1055 = vunpack.c.l.s4 1983009808
        %v1056 = vunpack.c.0.s8 %v1055
        %v1057 = vlaneseq
        %v1058 = vshrl.u32 %v1057, 7
        %v1059 = vsub.s32 %v1056, %v1058
        %v1060 = vrot.slane %v1041, %v1059
        %1061 = vrot.lane.b32.xlu0 %v1060, 64
        %v1062 = vpop.permute.xlu0 %1061
        %v1064 = vmul.f32 %v1052, %v1062
        %1066 = vrot.lane.b32.xlu0 %v1064, 64
        %v1067 = vpop.permute.xlu0 %1066
        %v1069 = vadd.f32 %v1001, %v1067
        %v1070 = vtanh.pop %v1069
        %v1071 = vsub.f32 1.0, %v1052
        %1073 = vrot.lane.b32.xlu0 %v1070, 96
        %v1074 = vpop.permute.xlu0 %1073
        %v1076 = vmul.f32 %v1071, %v1074
        %v1079 = vunpack.c.l.s4 1983009808
        %v1080 = vunpack.c.0.s8 %v1079
        %v1081 = vlaneseq
        %v1082 = vshrl.u32 %v1081, 7
        %v1083 = vsub.s32 %v1080, %v1082
        %v1084 = vrot.slane %v991, %v1083
        %1085 = vrot.lane.b32.xlu0 %v1084, 32
        %v1086 = vpop.permute.xlu0 %1085
        %v1088 = vmul.f32 %v1052, %v1086
        %v1089 = vadd.f32 %v1076, %v1088
        %v1090 = vstv %s998
        %vm1091 = vcmp.lt.s32.totalorder %v1090, %v368
        %v1092 = vsel %vm1091, 1, 0
        %1093 = vset.pattern.permute.xlu0 0
        %1094 = vperm.xlu0 %1093, %v1092
        %v1095 = vpop.permute.xlu0 %1094
        %vm1096 = vcmp.eq.s32.totalorder %v1095, 1
        %v1099 = vunpack.c.l.s4 1983009808
        %v1100 = vunpack.c.0.s8 %v1099
        %v1101 = vlaneseq
        %v1102 = vshrl.u32 %v1101, 7
        %v1103 = vsub.s32 %v1100, %v1102
        %v1104 = vrot.slane %v1089, %v1103
        %1105 = vrot.lane.b32.xlu0 %v1104, 96
        %v1106 = vpop.permute.xlu0 %1105
        %v1108 = vsel %vm1096, %v1106, 0.0
        %s1109 = smul.u32 %s994, 2
        %s1110 = scalar_lea.vmem %s335, %s1109 [#allocation8]
        %1111 = vst.msk [vmem:[%s1110] sm:$0x3] %vm507, %v1108
        %v1112 = vsel %vm1096, %v1106, %v991
        %s1113 = sadd.s32 %s369, 6
        %s1114 = smul.u32 %s33, 4294967291
        %s1115 = sadd.s32 %s1114, 6
        %s1116 = smul.u32 %s1113, 2
        %s1117 = ssub.s32 7, %s1116
        %s1118 = smul.u32 %s33, %s1117
        %s1119 = sadd.s32 %s1113, %s1118
        %s1120 = scalar_lea.vmem %s294, %s1115 [#allocation3]
        %v1121 = vld [vmem:[%s1120] sm:$0x1]
        %v1122 = vunpack.c.l.bf16 %v1121
        %v1123 = vpack.c.bf16 %v1112, %v1112
        %v1125 = vsel %vm398, %v1123, 0
        %1127 = vmatprep.subr.bf16.mxu0 0
        %1128 = vmatpush1.bf16.msra.mxu0 %v394
        %1129 = vmatprep.subr.bf16.mxu0 0
        %1130 = vmatpush1.bf16.msra.mxu0 %v395
        %1131 = vmatprep.subr.bf16.mxu0 0
        %1132 = vmatpush1.bf16.msra.mxu0 0
        %1133 = vmatprep.subr.bf16.mxu0 0
        %1134 = vmatpush1.bf16.msra.mxu0 0
        %1135 = vmatprep.subr.bf16.mxu0 0
        %1136 = vmatpush1.bf16.msra.mxu0 0
        %1137 = vmatprep.subr.bf16.mxu0 0
        %1138 = vmatpush1.bf16.msra.mxu0 0
        %1139 = vmatprep.subr.bf16.mxu0 0
        %1140 = vmatpush1.bf16.msra.mxu0 0
        %1141 = vmatprep.subr.bf16.mxu0 0
        %1142 = vmatpush1.bf16.msra.mxu0 0
        %1143 = vmatprep.subr.bf16.mxu0 0
        %1144 = vmatpush1.bf16.msra.mxu0 0
        %1145 = vmatprep.subr.bf16.mxu0 0
        %1146 = vmatpush1.bf16.msra.mxu0 0
        %1147 = vmatprep.subr.bf16.mxu0 0
        %1148 = vmatpush1.bf16.msra.mxu0 0
        %1149 = vmatprep.subr.bf16.mxu0 0
        %1150 = vmatpush1.bf16.msra.mxu0 0
        %1151 = vmatprep.subr.bf16.mxu0 0
        %1152 = vmatpush1.bf16.msra.mxu0 0
        %1153 = vmatprep.subr.bf16.mxu0 0
        %1154 = vmatpush1.bf16.msra.mxu0 0
        %1155 = vmatprep.subr.bf16.mxu0 0
        %1156 = vmatpush1.bf16.msra.mxu0 0
        %1157 = vmatprep.subr.bf16.mxu0 0
        %1158 = vmatpush1.bf16.msra.mxu0 0
        %1159 = vmatprep.mubr.bf16.mxu0 0
        %1160 = vmatmul.mubr.bf16.gmra.mrb[0].mxu0 %v1125
        %v1161 = vpop.f32.mrb[0].mxu0
        %v1162 = vadd.f32 %v384, %v1161
        %v1163 = vpop.f32.mrb[0].mxu0
        %v1164 = vpop.f32.mrb[0].mxu0
        %v1165 = vpop.f32.mrb[0].mxu0
        %1166 = vdwg.mxu0
        %v1167 = vadd.f32 %v1122, %v1162
        %v1168 = vxor.u32 %v1167, 2147483648
        %v1169 = vmul.f32 %v1168, 1.442695
        %v1170 = vpow.pop %v1169
        %v1171 = vadd.f32 %v1170, 1.0
        %v1172 = vrcp.pop %v1171
        %v1173 = vmul.f32 1.0, %v1172
        %v1176 = vunpack.c.l.s4 1983009808
        %v1177 = vunpack.c.0.s8 %v1176
        %v1178 = vlaneseq
        %v1179 = vshrl.u32 %v1178, 7
        %v1180 = vsub.s32 %v1177, %v1179
        %v1181 = vrot.slane %v1162, %v1180
        %1182 = vrot.lane.b32.xlu0 %v1181, 64
        %v1183 = vpop.permute.xlu0 %1182
        %v1185 = vmul.f32 %v1173, %v1183
        %1187 = vrot.lane.b32.xlu0 %v1185, 64
        %v1188 = vpop.permute.xlu0 %1187
        %v1190 = vadd.f32 %v1122, %v1188
        %v1191 = vtanh.pop %v1190
        %v1192 = vsub.f32 1.0, %v1173
        %1194 = vrot.lane.b32.xlu0 %v1191, 96
        %v1195 = vpop.permute.xlu0 %1194
        %v1197 = vmul.f32 %v1192, %v1195
        %v1200 = vunpack.c.l.s4 1983009808
        %v1201 = vunpack.c.0.s8 %v1200
        %v1202 = vlaneseq
        %v1203 = vshrl.u32 %v1202, 7
        %v1204 = vsub.s32 %v1201, %v1203
        %v1205 = vrot.slane %v1112, %v1204
        %1206 = vrot.lane.b32.xlu0 %v1205, 32
        %v1207 = vpop.permute.xlu0 %1206
        %v1209 = vmul.f32 %v1173, %v1207
        %v1210 = vadd.f32 %v1197, %v1209
        %v1211 = vstv %s1119
        %vm1212 = vcmp.lt.s32.totalorder %v1211, %v368
        %v1213 = vsel %vm1212, 1, 0
        %1214 = vset.pattern.permute.xlu0 0
        %1215 = vperm.xlu0 %1214, %v1213
        %v1216 = vpop.permute.xlu0 %1215
        %vm1217 = vcmp.eq.s32.totalorder %v1216, 1
        %v1220 = vunpack.c.l.s4 1983009808
        %v1221 = vunpack.c.0.s8 %v1220
        %v1222 = vlaneseq
        %v1223 = vshrl.u32 %v1222, 7
        %v1224 = vsub.s32 %v1221, %v1223
        %v1225 = vrot.slane %v1210, %v1224
        %1226 = vrot.lane.b32.xlu0 %v1225, 96
        %v1227 = vpop.permute.xlu0 %1226
        %v1229 = vsel %vm1217, %v1227, 0.0
        %s1230 = smul.u32 %s1115, 2
        %s1231 = scalar_lea.vmem %s335, %s1230 [#allocation8]
        %1232 = vst.msk [vmem:[%s1231] sm:$0x3] %vm507, %v1229
        %v1233 = vsel %vm1217, %v1227, %v1112
        %s1234 = sadd.s32 %s369, 7
        %s1235 = smul.u32 %s33, 4294967289
        %s1236 = sadd.s32 %s1235, 7
        %s1237 = smul.u32 %s1234, 2
        %s1238 = ssub.s32 7, %s1237
        %s1239 = smul.u32 %s33, %s1238
        %s1240 = sadd.s32 %s1234, %s1239
        %s1241 = scalar_lea.vmem %s294, %s1236 [#allocation3]
        %v1242 = vld [vmem:[%s1241] sm:$0x1]
        %v1243 = vunpack.c.l.bf16 %v1242
        %v1244 = vpack.c.bf16 %v1233, %v1233
        %v1246 = vsel %vm398, %v1244, 0
        %1248 = vmatprep.subr.bf16.mxu0 0
        %1249 = vmatpush1.bf16.msra.mxu0 %v394
        %1250 = vmatprep.subr.bf16.mxu0 0
        %1251 = vmatpush1.bf16.msra.mxu0 %v395
        %1252 = vmatprep.subr.bf16.mxu0 0
        %1253 = vmatpush1.bf16.msra.mxu0 0
        %1254 = vmatprep.subr.bf16.mxu0 0
        %1255 = vmatpush1.bf16.msra.mxu0 0
        %1256 = vmatprep.subr.bf16.mxu0 0
        %1257 = vmatpush1.bf16.msra.mxu0 0
        %1258 = vmatprep.subr.bf16.mxu0 0
        %1259 = vmatpush1.bf16.msra.mxu0 0
        %1260 = vmatprep.subr.bf16.mxu0 0
        %1261 = vmatpush1.bf16.msra.mxu0 0
        %1262 = vmatprep.subr.bf16.mxu0 0
        %1263 = vmatpush1.bf16.msra.mxu0 0
        %1264 = vmatprep.subr.bf16.mxu0 0
        %1265 = vmatpush1.bf16.msra.mxu0 0
        %1266 = vmatprep.subr.bf16.mxu0 0
        %1267 = vmatpush1.bf16.msra.mxu0 0
        %1268 = vmatprep.subr.bf16.mxu0 0
        %1269 = vmatpush1.bf16.msra.mxu0 0
        %1270 = vmatprep.subr.bf16.mxu0 0
        %1271 = vmatpush1.bf16.msra.mxu0 0
        %1272 = vmatprep.subr.bf16.mxu0 0
        %1273 = vmatpush1.bf16.msra.mxu0 0
        %1274 = vmatprep.subr.bf16.mxu0 0
        %1275 = vmatpush1.bf16.msra.mxu0 0
        %1276 = vmatprep.subr.bf16.mxu0 0
        %1277 = vmatpush1.bf16.msra.mxu0 0
        %1278 = vmatprep.subr.bf16.mxu0 0
        %1279 = vmatpush1.bf16.msra.mxu0 0
        %1280 = vmatprep.mubr.bf16.mxu0 0
        %1281 = vmatmul.mubr.bf16.gmra.mrb[0].mxu0 %v1246
        %v1282 = vpop.f32.mrb[0].mxu0
        %v1283 = vadd.f32 %v384, %v1282
        %v1284 = vpop.f32.mrb[0].mxu0
        %v1285 = vpop.f32.mrb[0].mxu0
        %v1286 = vpop.f32.mrb[0].mxu0
        %1287 = vdwg.mxu0
        %v1288 = vadd.f32 %v1243, %v1283
        %v1289 = vxor.u32 %v1288, 2147483648
        %v1290 = vmul.f32 %v1289, 1.442695
        %v1291 = vpow.pop %v1290
        %v1292 = vadd.f32 %v1291, 1.0
        %v1293 = vrcp.pop %v1292
        %v1294 = vmul.f32 1.0, %v1293
        %v1297 = vunpack.c.l.s4 1983009808
        %v1298 = vunpack.c.0.s8 %v1297
        %v1299 = vlaneseq
        %v1300 = vshrl.u32 %v1299, 7
        %v1301 = vsub.s32 %v1298, %v1300
        %v1302 = vrot.slane %v1283, %v1301
        %1303 = vrot.lane.b32.xlu0 %v1302, 64
        %v1304 = vpop.permute.xlu0 %1303
        %v1306 = vmul.f32 %v1294, %v1304
        %1308 = vrot.lane.b32.xlu0 %v1306, 64
        %v1309 = vpop.permute.xlu0 %1308
        %v1311 = vadd.f32 %v1243, %v1309
        %v1312 = vtanh.pop %v1311
        %v1313 = vsub.f32 1.0, %v1294
        %1315 = vrot.lane.b32.xlu0 %v1312, 96
        %v1316 = vpop.permute.xlu0 %1315
        %v1318 = vmul.f32 %v1313, %v1316
        %v1321 = vunpack.c.l.s4 1983009808
        %v1322 = vunpack.c.0.s8 %v1321
        %v1323 = vlaneseq
        %v1324 = vshrl.u32 %v1323, 7
        %v1325 = vsub.s32 %v1322, %v1324
        %v1326 = vrot.slane %v1233, %v1325
        %1327 = vrot.lane.b32.xlu0 %v1326, 32
        %v1328 = vpop.permute.xlu0 %1327
        %v1330 = vmul.f32 %v1294, %v1328
        %v1331 = vadd.f32 %v1318, %v1330
        %v1332 = vstv %s1240
        %vm1333 = vcmp.lt.s32.totalorder %v1332, %v368
        %v1334 = vsel %vm1333, 1, 0
        %1335 = vset.pattern.permute.xlu0 0
        %1336 = vperm.xlu0 %1335, %v1334
        %v1337 = vpop.permute.xlu0 %1336
        %vm1338 = vcmp.eq.s32.totalorder %v1337, 1
        %v1341 = vunpack.c.l.s4 1983009808
        %v1342 = vunpack.c.0.s8 %v1341
        %v1343 = vlaneseq
        %v1344 = vshrl.u32 %v1343, 7
        %v1345 = vsub.s32 %v1342, %v1344
        %v1346 = vrot.slane %v1331, %v1345
        %1347 = vrot.lane.b32.xlu0 %v1346, 96
        %v1348 = vpop.permute.xlu0 %1347
        %v1350 = vsel %vm1338, %v1348, 0.0
        %s1351 = smul.u32 %s1236, 2
        %s1352 = scalar_lea.vmem %s335, %s1351 [#allocation8]
        %1353 = vst.msk [vmem:[%s1352] sm:$0x3] %vm507, %v1350
        %v1354 = vsel %vm1338, %v1348, %v1233
        %1355 = vst.msk [vmem:[#allocation2] sm:$0x3] %vm507, %v1354
        // Predicated region
        $region49: #{tpu_custom_call.1} parent=35 // pred_check
          %p1356 = pneg %p357
        $region50: #{tpu_custom_call.1} parent=35 // pred_check_branch
          %1358 = sbr.rel (%p1356) target = $region52
        $region51: #{tpu_custom_call.1} parent=35 // pred_region
          %1359 = vst.msk [vmem:[%s342] sm:$0x3] %vm507, %v1354
        $region52: #{tpu_custom_call.1} parent=35 // pred_fallthru
          _
        %s1360 = sand.u32 %s168, 1
        %s1361 = scalar_lea.sflag [#allocation5], %s1360
        %s1362 = sand.u32 %s168, 1
        %s1363 = smul.addr %s1362, 16
        %s1364 = scalar_lea.vmem [#allocation8], %s1363
        %s1365 = sand.u32 %s194, 1
        %s1366 = scalar_lea.sflag [#allocation10], %s1365
        %s1367 = sand.u32 %s194, 1
        %s1368 = smul.addr %s1367, 2
        %s1369 = scalar_lea.vmem [#allocation9], %s1368
        // Predicated region
        $region53: #{tpu_custom_call.1} parent=35 // pred_check
          %p1370 = pneg %p178
        $region54: #{tpu_custom_call.1} parent=35 // pred_check_branch
          %1372 = sbr.rel (%p1370) target = $region56
        $region55: #{tpu_custom_call.1} parent=35 // pred_region
          %s1373 = smul.u32 %s34, 2
          %s1374 = ssub.s32 0, %s1373
          %s1375 = smul.u32 %s33, %s1374
          %s1376 = sadd.s32 %s34, %s1375
          %s1377 = smul.u32 8, %s1376
          %s1379 = ssub.s32 256, 256
          %1380 = vsyncadd %s1361, %s1379
          %s1381 = smul.addr %s33, 8
          %s1382 = sadd.s32 %s1377, %s1381
          %s1383 = smul.addr %s1382, 32
          %s1384 = scalar_lea.hbm %s4, %s1383
          %s1385 = sshll.u32 %s1364, 4
          %s1386 = int_to_ptr.vmem [resolvable:$true] %s1385
          %1391 = dma.vmem_to_hbm [thread:$0]  %s1386, 256, %s1384, %s1361, 32, 32, 2
        $region56: #{tpu_custom_call.1} parent=35 // pred_fallthru
          _
        // Predicated region
        $region57: #{tpu_custom_call.1} parent=35 // pred_check
          %p1392 = pneg %p204
        $region58: #{tpu_custom_call.1} parent=35 // pred_check_branch
          %1394 = sbr.rel (%p1392) target = $region60
        $region59: #{tpu_custom_call.1} parent=35 // pred_region
          %s1396 = ssub.s32 32, 32
          %1397 = vsyncadd %s1366, %s1396
          %s1398 = smul.addr %s33, 32
          %s1399 = scalar_lea.hbm %s5, %s1398
          %s1401 = sshll.u32 %s1369, 4
          %s1402 = int_to_ptr.vmem [resolvable:$true] %s1401
          %1404 = dma.vmem_to_hbm [thread:$0]  %s1402, 32, %s1399, %s1366
        $region60: #{tpu_custom_call.1} parent=35 // pred_fallthru
          _
      $region36: #{tpu_custom_call.1} parent=5 // pred_fallthru
        _
      %p1405 = scmp.le.s32.totalorder 2, %s24
      // Predicated region
      $region61: #{tpu_custom_call.1} parent=5 // pred_check
        %p1406 = pneg %p1405
      $region62: #{tpu_custom_call.1} parent=5 // pred_check_branch
        %1408 = sbr.rel (%p1406) target = $region64
      $region63: #{tpu_custom_call.1} parent=5 // pred_region
        %s1409 = ssub.s32 %s24, 2
        // Predicated region
        $region65: #{tpu_custom_call.1} parent=63 // pred_check
          %p1410 = pneg %p184
        $region66: #{tpu_custom_call.1} parent=63 // pred_check_branch
          %1412 = sbr.rel (%p1410) target = $region68
        $region67: #{tpu_custom_call.1} parent=63 // pred_region
          %s1413 = sand.u32 %s169, 1
          %s1414 = scalar_lea.sflag [#allocation5], %s1413
          %s1415 = sand.u32 %s169, 1
          %s1416 = smul.addr %s1415, 16
          %s1417 = scalar_lea.vmem [#allocation8], %s1416
          %1418 = dma.done %s1414, 256
        $region68: #{tpu_custom_call.1} parent=63 // pred_fallthru
          _
        // Predicated region
        $region69: #{tpu_custom_call.1} parent=63 // pred_check
          %p1419 = pneg %p210
        $region70: #{tpu_custom_call.1} parent=63 // pred_check_branch
          %1421 = sbr.rel (%p1419) target = $region72
        $region71: #{tpu_custom_call.1} parent=63 // pred_region
          %s1422 = sand.u32 %s195, 1
          %s1423 = scalar_lea.sflag [#allocation10], %s1422
          %s1424 = sand.u32 %s195, 1
          %s1425 = smul.addr %s1424, 2
          %s1426 = scalar_lea.vmem [#allocation9], %s1425
          %1427 = dma.done %s1423, 32
        $region72: #{tpu_custom_call.1} parent=63 // pred_fallthru
          _
      $region64: #{tpu_custom_call.1} parent=5 // pred_fallthru
        _
    $region6: #{tpu_custom_call.1} parent=1 // loop_footer
      %s28 = sadd.s32 1, %s24
    $region7: #{tpu_custom_call.1} parent=1 // loop_footer_branch
      %23 = sbr.rel target = $region3
    $region8: #{tpu_custom_call.1} parent=1 // loop_exit
      _
    %1428 = vsyncpa [#allocation4], 1
    %s1429 = scalar_lea.sflag [#allocation4], 1
    %1430 = vsyncpa %s1429, 1
    %1431 = vsyncpa [#allocation7], 1
    %s1432 = scalar_lea.sflag [#allocation7], 1
    %1433 = vsyncpa %s1432, 1
    %1434 = vsyncpa [#allocation5], 1
    %s1435 = scalar_lea.sflag [#allocation5], 1
    %1436 = vsyncpa %s1435, 1
    %1437 = vsyncpa [#allocation10], 1
    %s1438 = scalar_lea.sflag [#allocation10], 1
    %1439 = vsyncpa %s1438, 1

</llo_original>
